<compile_context>
chip_gen: v7x
topology: tpu7x:2x2x1
jax: 0.10.0
libtpu: 0.0.40
codegen_flags: <defaults>
</compile_context>

<pallas_src>
import math

import numpy as np
import jax
import jax.numpy as jnp
from jax.experimental import pallas as pl
from jax.experimental.pallas import tpu as pltpu


# ---------------------------------------------------------------------------
# Gaussian window helpers (host-side constants)
# ---------------------------------------------------------------------------
def _gaussian_1d(window_size, sigma):
    g = np.array(
        [math.exp(-((x - window_size // 2) ** 2) / (2.0 * sigma ** 2))
         for x in range(window_size)],
        dtype=np.float64)
    return (g / g.sum()).astype(np.float32)


def _band_matrix(n, g):
    """M[r, c] = g[c - r + half] (zero-padded 'same' 1-D convolution matrix)."""
    ws = g.shape[0]
    half = ws // 2
    idx = np.arange(n)
    off = idx[None, :] - idx[:, None] + half
    valid = (off >= 0) & (off < ws)
    return np.where(valid, g[np.clip(off, 0, ws - 1)], 0.0).astype(np.float32)


# ---------------------------------------------------------------------------
# Pallas kernels
# ---------------------------------------------------------------------------
def _ssim_l1_kernel(a_ref, bt_ref, x1_ref, x2_ref,
                    ssim_out_ref, l1_out_ref, acc_ref):
    """One grid step = one (H, W) channel-image of the batch.

    Accumulates sum(ssim_map) and sum(|x1 - x2|) over the whole grid into SMEM
    scratch; writes the two scalar outputs at the last step.
    """
    i = pl.program_id(0)

    @pl.when(i == 0)
    def _():
        acc_ref[0] = jnp.float32(0.0)
        acc_ref[1] = jnp.float32(0.0)

    x1 = x1_ref[0]          # (H, W)
    x2 = x2_ref[0]          # (H, W)
    A = a_ref[...]          # (H, H)  blur along rows (H axis)
    BT = bt_ref[...]        # (W, W)  blur along cols (W axis)

    def blur(v):
        t = jnp.dot(A, v, preferred_element_type=jnp.float32)
        return jnp.dot(t, BT, preferred_element_type=jnp.float32)

    mu1 = blur(x1)
    mu2 = blur(x2)
    m11 = blur(x1 * x1)
    m22 = blur(x2 * x2)
    m12 = blur(x1 * x2)

    mu1_sq = mu1 * mu1
    mu2_sq = mu2 * mu2
    mu1_mu2 = mu1 * mu2
    sigma1_sq = m11 - mu1_sq
    sigma2_sq = m22 - mu2_sq
    sigma12 = m12 - mu1_mu2

    c1 = jnp.float32(0.01 ** 2)
    c2 = jnp.float32(0.03 ** 2)
    num = (2.0 * mu1_mu2 + c1) * (2.0 * sigma12 + c2)
    den = (mu1_sq + mu2_sq + c1) * (sigma1_sq + sigma2_sq + c2)
    ssim_map = num / den

    acc_ref[0] += jnp.sum(ssim_map)
    acc_ref[1] += jnp.sum(jnp.abs(x1 - x2))

    @pl.when(i == pl.num_programs(0) - 1)
    def _():
        ssim_out_ref[0] = acc_ref[0]
        l1_out_ref[0] = acc_ref[1]


def _asym_kernel(w_ref, est_ref, gt_ref, out_ref, acc_ref):
    """Grid (K, N*C): accumulate sum_k w[k] * sum(|est[k] - gt|)."""
    k = pl.program_id(0)
    j = pl.program_id(1)

    @pl.when((k == 0) & (j == 0))
    def _():
        acc_ref[0] = jnp.float32(0.0)

    diff_sum = jnp.sum(jnp.abs(est_ref[0, 0] - gt_ref[0]))
    acc_ref[0] += w_ref[k] * diff_sum

    @pl.when((k == pl.num_programs(0) - 1) & (j == pl.num_programs(1) - 1))
    def _():
        out_ref[0] = acc_ref[0]


# ---------------------------------------------------------------------------
# Wrappers
# ---------------------------------------------------------------------------
def _ssim_l1_sums(img1, img2, A, BT):
    """Returns (sum(ssim_map), sum(|img1 - img2|)) over the whole batch."""
    N, C, H, W = img1.shape
    NC = N * C
    x1 = img1.reshape(NC, H, W)
    x2 = img2.reshape(NC, H, W)

    ssim_sum, l1_sum = pl.pallas_call(
        _ssim_l1_kernel,
        out_shape=(jax.ShapeDtypeStruct((1,), jnp.float32),
                   jax.ShapeDtypeStruct((1,), jnp.float32)),
        grid_spec=pltpu.PrefetchScalarGridSpec(
            num_scalar_prefetch=0,
            grid=(NC,),
            in_specs=[
                pl.BlockSpec((H, H), lambda i: (0, 0)),
                pl.BlockSpec((W, W), lambda i: (0, 0)),
                pl.BlockSpec((1, H, W), lambda i: (i, 0, 0)),
                pl.BlockSpec((1, H, W), lambda i: (i, 0, 0)),
            ],
            out_specs=(
                pl.BlockSpec(memory_space=pltpu.MemorySpace.SMEM),
                pl.BlockSpec(memory_space=pltpu.MemorySpace.SMEM),
            ),
            scratch_shapes=[pltpu.SMEM((2,), jnp.float32)],
        ),
        compiler_params=pltpu.CompilerParams(
            dimension_semantics=("arbitrary",)),
    )(A, BT, x1, x2)
    return ssim_sum[0], l1_sum[0]


def _asym_weighted_l1_sum(weight, est_noise, gt_noise):
    """Returns sum_k weight[k] * sum(|est_noise[k] - gt_noise|)."""
    K = est_noise.shape[0]
    N, C, H, W = gt_noise.shape
    NC = N * C
    est = est_noise.reshape(K, NC, H, W)
    gt = gt_noise.reshape(NC, H, W)

    out = pl.pallas_call(
        _asym_kernel,
        out_shape=jax.ShapeDtypeStruct((1,), jnp.float32),
        grid_spec=pltpu.PrefetchScalarGridSpec(
            num_scalar_prefetch=0,
            grid=(K, NC),
            in_specs=[
                pl.BlockSpec(memory_space=pltpu.MemorySpace.SMEM),
                pl.BlockSpec((1, 1, H, W), lambda k, j: (k, j, 0, 0)),
                pl.BlockSpec((1, H, W), lambda k, j: (j, 0, 0)),
            ],
            out_specs=pl.BlockSpec(memory_space=pltpu.MemorySpace.SMEM),
            scratch_shapes=[pltpu.SMEM((1,), jnp.float32)],
        ),
        compiler_params=pltpu.CompilerParams(
            dimension_semantics=("arbitrary", "arbitrary")),
    )(weight, est, gt)
    return out[0]


@jax.jit
def fixed_loss_gray_forward(weight, out_image, gt_image, est_noise, gt_noise):
    """Pallas implementation of cbdnet.fixed_loss_gray.forward.

    weight:    (K,)              per-estimate weights
    out_image: (N, C, H, W)
    gt_image:  (N, C, H, W)
    est_noise: (K, N, C, H, W)   K noise estimates
    gt_noise:  (N, C, H, W)
    returns scalar loss = L1 + 0.1 * asym + 0.25 * (-log10(mean(ssim_map)))
    """
    window_size, sigma = 11, 1.5
    N, C, H, W = out_image.shape

    g = _gaussian_1d(window_size, sigma)
    A = jnp.asarray(_band_matrix(H, g))          # (H, H)
    BT = jnp.asarray(_band_matrix(W, g).T)       # (W, W)

    ssim_sum, l1_sum = _ssim_l1_sums(out_image.astype(jnp.float32),
                                     gt_image.astype(jnp.float32), A, BT)
    numel_img = float(N * C * H * W)
    l1_loss = l1_sum / numel_img
    loss_ssim = -jnp.log10(ssim_sum / numel_img)

    asym_sum = _asym_weighted_l1_sum(weight.astype(jnp.float32),
                                     est_noise.astype(jnp.float32),
                                     gt_noise.astype(jnp.float32))
    numel_noise = float(np.prod(gt_noise.shape))
    asym_loss = asym_sum / numel_noise

    return l1_loss + 0.1 * asym_loss + 0.25 * loss_ssim


# ---------------------------------------------------------------------------
# Pure-JAX reference (direct translation of the torch module)
# ---------------------------------------------------------------------------
def reference_loss(weight, out_image, gt_image, est_noise, gt_noise,
                   window_size=11, sigma=1.5):
    N, C, H, W = out_image.shape
    g = _gaussian_1d(window_size, sigma)
    w2d = np.outer(g, g).astype(np.float32)
    kern = jnp.asarray(
        np.ascontiguousarray(
            np.broadcast_to(w2d, (C, 1, window_size, window_size))))
    pad = window_size // 2

    def blur(x):
        return jax.lax.conv_general_dilated(
            x, kern, (1, 1), [(pad, pad), (pad, pad)],
            feature_group_count=C,
            dimension_numbers=("NCHW", "OIHW", "NCHW"))

    mu1, mu2 = blur(out_image), blur(gt_image)
    mu1_sq, mu2_sq, mu1_mu2 = mu1 * mu1, mu2 * mu2, mu1 * mu2
    s1 = blur(out_image * out_image) - mu1_sq
    s2 = blur(gt_image * gt_image) - mu2_sq
    s12 = blur(out_image * gt_image) - mu1_mu2
    c1, c2 = 0.01 ** 2, 0.03 ** 2
    ssim_map = ((2 * mu1_mu2 + c1) * (2 * s12 + c2)
                / ((mu1_sq + mu2_sq + c1) * (s1 + s2 + c2)))
    loss_ssim = -jnp.log10(jnp.mean(ssim_map))

    l1 = jnp.mean(jnp.abs(out_image - gt_image))
    asym = 0.0
    for i in range(est_noise.shape[0]):
        asym = asym + weight[i] * jnp.mean(jnp.abs(est_noise[i] - gt_noise))
    return l1 + 0.1 * asym + 0.25 * loss_ssim


# ---------------------------------------------------------------------------
if __name__ == "__main__":
    key = jax.random.PRNGKey(0)
    k1, k2, k3, k4, k5 = jax.random.split(key, 5)

    N, C, H, W = 2, 3, 16, 16
    K = 2  # number of noise estimates

    gt_image = jax.random.uniform(k1, (N, C, H, W), dtype=jnp.float32)
    out_image = jnp.clip(
        gt_image + 0.05 * jax.random.normal(k2, (N, C, H, W), dtype=jnp.float32),
        0.0, 1.0)
    gt_noise = 0.1 * jax.random.uniform(k3, (N, C, H, W), dtype=jnp.float32)
    est_noise = gt_noise[None] + 0.02 * jax.random.normal(
        k4, (K, N, C, H, W), dtype=jnp.float32)
    weight = jax.random.uniform(k5, (K,), dtype=jnp.float32) + 0.5

    loss = fixed_loss_gray_forward(weight, out_image, gt_image,
                                   est_noise, gt_noise)
    loss = jax.block_until_ready(loss)

    ref = jax.block_until_ready(
        reference_loss(weight, out_image, gt_image, est_noise, gt_noise))

    assert loss.shape == ()
    assert bool(jnp.isfinite(loss)), "non-finite loss"
    assert jnp.allclose(loss, ref, atol=1e-4, rtol=1e-4), (loss, ref)

    print("KERNEL_OK")
</pallas_src>

<mosaic_0001>
module attributes {stable_mosaic.version = 11 : i64} {
  func.func @_asym_kernel(%arg0: i32, %arg1: i32, %arg2: memref<2xf32, #tpu.memory_space<smem>>, %arg3: memref<1x1x16x16xf32, #tpu.memory_space<vmem>>, %arg4: memref<1x16x16xf32, #tpu.memory_space<vmem>>, %arg5: memref<1xf32, #tpu.memory_space<smem>>, %arg6: memref<1xf32, #tpu.memory_space<smem>>) attributes {dimension_semantics = [#tpu.dimension_semantics<arbitrary>, #tpu.dimension_semantics<arbitrary>], iteration_bounds = array<i64: 2, 6>, scalar_prefetch = 0 : i64, scratch_operands = 1 : i64, tpu.core_type = #tpu.core_type<tc>, window_params = [{transform_indices = @transform_0, window_bounds = array<i64: 2>}, {transform_indices = @transform_1, window_bounds = array<i64: 1, 1, 16, 16>}, {transform_indices = @transform_2, window_bounds = array<i64: 1, 16, 16>}, {transform_indices = @transform_3, window_bounds = array<i64: 1>}]} {
    %c0_i32 = arith.constant 0 : i32
    %0 = arith.cmpi eq, %arg0, %c0_i32 : i32
    %c0_i32_0 = arith.constant 0 : i32
    %1 = arith.cmpi eq, %arg1, %c0_i32_0 : i32
    %2 = arith.andi %0, %1 : i1
    %3 = arith.extui %2 : i1 to i32
    %c0_i32_1 = arith.constant 0 : i32
    %4 = arith.cmpi ne, %3, %c0_i32_1 : i32
    scf.if %4 {
      %cst_11 = arith.constant 0.000000e+00 : f32
      %c0_12 = arith.constant 0 : index
      %26 = memref.load %arg6[%c0_12] : memref<1xf32, #tpu.memory_space<smem>>
      memref.store %cst_11, %arg6[%c0_12] : memref<1xf32, #tpu.memory_space<smem>>
    } else {
    }
    %c0 = arith.constant 0 : index
    %c0_2 = arith.constant 0 : index
    %c0_3 = arith.constant 0 : index
    %c0_4 = arith.constant 0 : index
    %5 = vector.load %arg3[%c0, %c0_2, %c0_3, %c0_4] : memref<1x1x16x16xf32, #tpu.memory_space<vmem>>, vector<1x1x16x16xf32>
    %6 = vector.shape_cast %5 : vector<1x1x16x16xf32> to vector<16x16xf32>
    %c0_5 = arith.constant 0 : index
    %c0_6 = arith.constant 0 : index
    %c0_7 = arith.constant 0 : index
    %7 = vector.load %arg4[%c0_5, %c0_6, %c0_7] : memref<1x16x16xf32, #tpu.memory_space<vmem>>, vector<1x16x16xf32>
    %8 = vector.shape_cast %7 : vector<1x16x16xf32> to vector<16x16xf32>
    %9 = arith.subf %6, %8 : vector<16x16xf32>
    %10 = math.absf %9 : vector<16x16xf32>
    %11 = vector.shape_cast %10 : vector<16x16xf32> to vector<1x16x16xf32>
    %cst = arith.constant dense<0.000000e+00> : vector<1xf32>
    %12 = vector.multi_reduction <add>, %11, %cst [1, 2] : vector<1x16x16xf32> to vector<1xf32>
    %13 = vector.shape_cast %12 : vector<1xf32> to vector<1x1x1xf32>
    %14 = vector.extract %13[0, 0, 0] : f32 from vector<1x1x1xf32>
    %c0_8 = arith.constant 0 : index
    %15 = memref.load %arg6[%c0_8] : memref<1xf32, #tpu.memory_space<smem>>
    %16 = arith.index_cast %arg0 : i32 to index
    %17 = memref.load %arg2[%16] : memref<2xf32, #tpu.memory_space<smem>>
    %18 = arith.mulf %17, %14 : f32
    %19 = arith.addf %15, %18 : f32
    %c0_9 = arith.constant 0 : index
    %20 = memref.load %arg6[%c0_9] : memref<1xf32, #tpu.memory_space<smem>>
    memref.store %19, %arg6[%c0_9] : memref<1xf32, #tpu.memory_space<smem>>
    %c1_i32 = arith.constant 1 : i32
    %21 = arith.cmpi eq, %arg0, %c1_i32 : i32
    %c5_i32 = arith.constant 5 : i32
    %22 = arith.cmpi eq, %arg1, %c5_i32 : i32
    %23 = arith.andi %21, %22 : i1
    %24 = arith.extui %23 : i1 to i32
    %c0_i32_10 = arith.constant 0 : i32
    %25 = arith.cmpi ne, %24, %c0_i32_10 : i32
    scf.if %25 {
      %c0_11 = arith.constant 0 : index
      %26 = memref.load %arg6[%c0_11] : memref<1xf32, #tpu.memory_space<smem>>
      %c0_12 = arith.constant 0 : index
      %27 = memref.load %arg5[%c0_12] : memref<1xf32, #tpu.memory_space<smem>>
      memref.store %26, %arg5[%c0_12] : memref<1xf32, #tpu.memory_space<smem>>
    } else {
    }
    return
  }
  func.func @transform_0(%arg0: i32, %arg1: i32) -> i32 {
    %c0_i32 = arith.constant 0 : i32
    %c0_i32_0 = arith.constant 0 : i32
    return %c0_i32 : i32
  }
  func.func @transform_1(%arg0: i32, %arg1: i32) -> (i32, i32, i32, i32) {
    %c0_i32 = arith.constant 0 : i32
    %c0_i32_0 = arith.constant 0 : i32
    %c0_i32_1 = arith.constant 0 : i32
    return %arg0, %arg1, %c0_i32, %c0_i32_0 : i32, i32, i32, i32
  }
  func.func @transform_2(%arg0: i32, %arg1: i32) -> (i32, i32, i32) {
    %c0_i32 = arith.constant 0 : i32
    %c0_i32_0 = arith.constant 0 : i32
    %c0_i32_1 = arith.constant 0 : i32
    return %arg1, %c0_i32, %c0_i32_0 : i32, i32, i32
  }
  func.func @transform_3(%arg0: i32, %arg1: i32) -> i32 {
    %c0_i32 = arith.constant 0 : i32
    %c0_i32_0 = arith.constant 0 : i32
    return %c0_i32 : i32
  }
}

module attributes {stable_mosaic.version = 11 : i64} {
  func.func @_ssim_l1_kernel(%arg0: i32, %arg1: memref<16x16xf32, #tpu.memory_space<vmem>>, %arg2: memref<16x16xf32, #tpu.memory_space<vmem>>, %arg3: memref<1x16x16xf32, #tpu.memory_space<vmem>>, %arg4: memref<1x16x16xf32, #tpu.memory_space<vmem>>, %arg5: memref<1xf32, #tpu.memory_space<smem>>, %arg6: memref<1xf32, #tpu.memory_space<smem>>, %arg7: memref<2xf32, #tpu.memory_space<smem>>) attributes {dimension_semantics = [#tpu.dimension_semantics<arbitrary>], iteration_bounds = array<i64: 6>, scalar_prefetch = 0 : i64, scratch_operands = 1 : i64, tpu.core_type = #tpu.core_type<tc>, window_params = [{pipeline_mode = #tpu.pipeline_mode<synchronous>, transform_indices = @transform_0, window_bounds = array<i64: 16, 16>}, {pipeline_mode = #tpu.pipeline_mode<synchronous>, transform_indices = @transform_1, window_bounds = array<i64: 16, 16>}, {transform_indices = @transform_2, window_bounds = array<i64: 1, 16, 16>}, {transform_indices = @transform_3, window_bounds = array<i64: 1, 16, 16>}, {transform_indices = @transform_4, window_bounds = array<i64: 1>}, {transform_indices = @transform_5, window_bounds = array<i64: 1>}]} {
    %c0_i32 = arith.constant 0 : i32
    %0 = arith.cmpi eq, %arg0, %c0_i32 : i32
    %1 = arith.extui %0 : i1 to i32
    %c0_i32_0 = arith.constant 0 : i32
    %2 = arith.cmpi ne, %1, %c0_i32_0 : i32
    scf.if %2 {
      %cst_31 = arith.constant 0.000000e+00 : f32
      %c0_32 = arith.constant 0 : index
      %64 = memref.load %arg7[%c0_32] : memref<2xf32, #tpu.memory_space<smem>>
      memref.store %cst_31, %arg7[%c0_32] : memref<2xf32, #tpu.memory_space<smem>>
      %cst_33 = arith.constant 0.000000e+00 : f32
      %c1_34 = arith.constant 1 : index
      %65 = memref.load %arg7[%c1_34] : memref<2xf32, #tpu.memory_space<smem>>
      memref.store %cst_33, %arg7[%c1_34] : memref<2xf32, #tpu.memory_space<smem>>
    } else {
    }
    %c0 = arith.constant 0 : index
    %c0_1 = arith.constant 0 : index
    %c0_2 = arith.constant 0 : index
    %3 = vector.load %arg3[%c0, %c0_1, %c0_2] : memref<1x16x16xf32, #tpu.memory_space<vmem>>, vector<1x16x16xf32>
    %4 = vector.shape_cast %3 : vector<1x16x16xf32> to vector<16x16xf32>
    %c0_3 = arith.constant 0 : index
    %c0_4 = arith.constant 0 : index
    %c0_5 = arith.constant 0 : index
    %5 = vector.load %arg4[%c0_3, %c0_4, %c0_5] : memref<1x16x16xf32, #tpu.memory_space<vmem>>, vector<1x16x16xf32>
    %6 = vector.shape_cast %5 : vector<1x16x16xf32> to vector<16x16xf32>
    %c0_6 = arith.constant 0 : index
    %c0_7 = arith.constant 0 : index
    %7 = vector.load %arg1[%c0_6, %c0_7] : memref<16x16xf32, #tpu.memory_space<vmem>>, vector<16x16xf32>
    %c0_8 = arith.constant 0 : index
    %c0_9 = arith.constant 0 : index
    %8 = vector.load %arg2[%c0_8, %c0_9] : memref<16x16xf32, #tpu.memory_space<vmem>>, vector<16x16xf32>
    %cst = arith.constant dense<0.000000e+00> : vector<16x16xf32>
    %9 = tpu.matmul %7, %4, %cst {dimension_numbers = #tpu.dot_dimension_numbers<[1], [0], [0], [1], [0, 0, 1, 1], [], []>} : vector<16x16xf32>, vector<16x16xf32>, vector<16x16xf32> -> vector<16x16xf32>
    %cst_10 = arith.constant dense<0.000000e+00> : vector<16x16xf32>
    %10 = tpu.matmul %9, %8, %cst_10 {dimension_numbers = #tpu.dot_dimension_numbers<[1], [0], [0], [1], [0, 0, 1, 1], [], []>} : vector<16x16xf32>, vector<16x16xf32>, vector<16x16xf32> -> vector<16x16xf32>
    %cst_11 = arith.constant dense<0.000000e+00> : vector<16x16xf32>
    %11 = tpu.matmul %7, %6, %cst_11 {dimension_numbers = #tpu.dot_dimension_numbers<[1], [0], [0], [1], [0, 0, 1, 1], [], []>} : vector<16x16xf32>, vector<16x16xf32>, vector<16x16xf32> -> vector<16x16xf32>
    %cst_12 = arith.constant dense<0.000000e+00> : vector<16x16xf32>
    %12 = tpu.matmul %11, %8, %cst_12 {dimension_numbers = #tpu.dot_dimension_numbers<[1], [0], [0], [1], [0, 0, 1, 1], [], []>} : vector<16x16xf32>, vector<16x16xf32>, vector<16x16xf32> -> vector<16x16xf32>
    %13 = arith.mulf %4, %4 : vector<16x16xf32>
    %cst_13 = arith.constant dense<0.000000e+00> : vector<16x16xf32>
    %14 = tpu.matmul %7, %13, %cst_13 {dimension_numbers = #tpu.dot_dimension_numbers<[1], [0], [0], [1], [0, 0, 1, 1], [], []>} : vector<16x16xf32>, vector<16x16xf32>, vector<16x16xf32> -> vector<16x16xf32>
    %cst_14 = arith.constant dense<0.000000e+00> : vector<16x16xf32>
    %15 = tpu.matmul %14, %8, %cst_14 {dimension_numbers = #tpu.dot_dimension_numbers<[1], [0], [0], [1], [0, 0, 1, 1], [], []>} : vector<16x16xf32>, vector<16x16xf32>, vector<16x16xf32> -> vector<16x16xf32>
    %16 = arith.mulf %6, %6 : vector<16x16xf32>
    %cst_15 = arith.constant dense<0.000000e+00> : vector<16x16xf32>
    %17 = tpu.matmul %7, %16, %cst_15 {dimension_numbers = #tpu.dot_dimension_numbers<[1], [0], [0], [1], [0, 0, 1, 1], [], []>} : vector<16x16xf32>, vector<16x16xf32>, vector<16x16xf32> -> vector<16x16xf32>
    %cst_16 = arith.constant dense<0.000000e+00> : vector<16x16xf32>
    %18 = tpu.matmul %17, %8, %cst_16 {dimension_numbers = #tpu.dot_dimension_numbers<[1], [0], [0], [1], [0, 0, 1, 1], [], []>} : vector<16x16xf32>, vector<16x16xf32>, vector<16x16xf32> -> vector<16x16xf32>
    %19 = arith.mulf %4, %6 : vector<16x16xf32>
    %cst_17 = arith.constant dense<0.000000e+00> : vector<16x16xf32>
    %20 = tpu.matmul %7, %19, %cst_17 {dimension_numbers = #tpu.dot_dimension_numbers<[1], [0], [0], [1], [0, 0, 1, 1], [], []>} : vector<16x16xf32>, vector<16x16xf32>, vector<16x16xf32> -> vector<16x16xf32>
    %cst_18 = arith.constant dense<0.000000e+00> : vector<16x16xf32>
    %21 = tpu.matmul %20, %8, %cst_18 {dimension_numbers = #tpu.dot_dimension_numbers<[1], [0], [0], [1], [0, 0, 1, 1], [], []>} : vector<16x16xf32>, vector<16x16xf32>, vector<16x16xf32> -> vector<16x16xf32>
    %22 = arith.mulf %10, %10 : vector<16x16xf32>
    %23 = arith.mulf %12, %12 : vector<16x16xf32>
    %24 = arith.mulf %10, %12 : vector<16x16xf32>
    %25 = arith.subf %15, %22 : vector<16x16xf32>
    %26 = arith.subf %18, %23 : vector<16x16xf32>
    %27 = arith.subf %21, %24 : vector<16x16xf32>
    %cst_19 = arith.constant 2.000000e+00 : f32
    %28 = vector.broadcast %cst_19 : f32 to vector<16x16xf32>
    %29 = arith.mulf %28, %24 : vector<16x16xf32>
    %cst_20 = arith.constant 9.99999974E-5 : f32
    %30 = vector.broadcast %cst_20 : f32 to vector<16x16xf32>
    %31 = arith.addf %29, %30 : vector<16x16xf32>
    %cst_21 = arith.constant 2.000000e+00 : f32
    %32 = vector.broadcast %cst_21 : f32 to vector<16x16xf32>
    %33 = arith.mulf %32, %27 : vector<16x16xf32>
    %cst_22 = arith.constant 8.99999984E-4 : f32
    %34 = vector.broadcast %cst_22 : f32 to vector<16x16xf32>
    %35 = arith.addf %33, %34 : vector<16x16xf32>
    %36 = arith.mulf %31, %35 : vector<16x16xf32>
    %37 = arith.addf %22, %23 : vector<16x16xf32>
    %cst_23 = arith.constant 9.99999974E-5 : f32
    %38 = vector.broadcast %cst_23 : f32 to vector<16x16xf32>
    %39 = arith.addf %37, %38 : vector<16x16xf32>
    %40 = arith.addf %25, %26 : vector<16x16xf32>
    %cst_24 = arith.constant 8.99999984E-4 : f32
    %41 = vector.broadcast %cst_24 : f32 to vector<16x16xf32>
    %42 = arith.addf %40, %41 : vector<16x16xf32>
    %43 = arith.mulf %39, %42 : vector<16x16xf32>
    %44 = arith.divf %36, %43 : vector<16x16xf32>
    %c0_25 = arith.constant 0 : index
    %45 = memref.load %arg7[%c0_25] : memref<2xf32, #tpu.memory_space<smem>>
    %46 = vector.shape_cast %44 : vector<16x16xf32> to vector<1x16x16xf32>
    %cst_26 = arith.constant dense<0.000000e+00> : vector<1xf32>
    %47 = vector.multi_reduction <add>, %46, %cst_26 [1, 2] : vector<1x16x16xf32> to vector<1xf32>
    %48 = vector.shape_cast %47 : vector<1xf32> to vector<1x1x1xf32>
    %49 = vector.extract %48[0, 0, 0] : f32 from vector<1x1x1xf32>
    %50 = arith.addf %45, %49 : f32
    %c0_27 = arith.constant 0 : index
    %51 = memref.load %arg7[%c0_27] : memref<2xf32, #tpu.memory_space<smem>>
    memref.store %50, %arg7[%c0_27] : memref<2xf32, #tpu.memory_space<smem>>
    %c1 = arith.constant 1 : index
    %52 = memref.load %arg7[%c1] : memref<2xf32, #tpu.memory_space<smem>>
    %53 = arith.subf %4, %6 : vector<16x16xf32>
    %54 = math.absf %53 : vector<16x16xf32>
    %55 = vector.shape_cast %54 : vector<16x16xf32> to vector<1x16x16xf32>
    %cst_28 = arith.constant dense<0.000000e+00> : vector<1xf32>
    %56 = vector.multi_reduction <add>, %55, %cst_28 [1, 2] : vector<1x16x16xf32> to vector<1xf32>
    %57 = vector.shape_cast %56 : vector<1xf32> to vector<1x1x1xf32>
    %58 = vector.extract %57[0, 0, 0] : f32 from vector<1x1x1xf32>
    %59 = arith.addf %52, %58 : f32
    %c1_29 = arith.constant 1 : index
    %60 = memref.load %arg7[%c1_29] : memref<2xf32, #tpu.memory_space<smem>>
    memref.store %59, %arg7[%c1_29] : memref<2xf32, #tpu.memory_space<smem>>
    %c5_i32 = arith.constant 5 : i32
    %61 = arith.cmpi eq, %arg0, %c5_i32 : i32
    %62 = arith.extui %61 : i1 to i32
    %c0_i32_30 = arith.constant 0 : i32
    %63 = arith.cmpi ne, %62, %c0_i32_30 : i32
    scf.if %63 {
      %c0_31 = arith.constant 0 : index
      %64 = memref.load %arg7[%c0_31] : memref<2xf32, #tpu.memory_space<smem>>
      %c0_32 = arith.constant 0 : index
      %65 = memref.load %arg5[%c0_32] : memref<1xf32, #tpu.memory_space<smem>>
      memref.store %64, %arg5[%c0_32] : memref<1xf32, #tpu.memory_space<smem>>
      %c1_33 = arith.constant 1 : index
      %66 = memref.load %arg7[%c1_33] : memref<2xf32, #tpu.memory_space<smem>>
      %c0_34 = arith.constant 0 : index
      %67 = memref.load %arg6[%c0_34] : memref<1xf32, #tpu.memory_space<smem>>
      memref.store %66, %arg6[%c0_34] : memref<1xf32, #tpu.memory_space<smem>>
    } else {
    }
    return
  }
  func.func @transform_0(%arg0: i32) -> (i32, i32) {
    %c0_i32 = arith.constant 0 : i32
    %c0_i32_0 = arith.constant 0 : i32
    %c0_i32_1 = arith.constant 0 : i32
    return %c0_i32, %c0_i32_0 : i32, i32
  }
  func.func @transform_1(%arg0: i32) -> (i32, i32) {
    %c0_i32 = arith.constant 0 : i32
    %c0_i32_0 = arith.constant 0 : i32
    %c0_i32_1 = arith.constant 0 : i32
    return %c0_i32, %c0_i32_0 : i32, i32
  }
  func.func @transform_2(%arg0: i32) -> (i32, i32, i32) {
    %c0_i32 = arith.constant 0 : i32
    %c0_i32_0 = arith.constant 0 : i32
    %c0_i32_1 = arith.constant 0 : i32
    return %arg0, %c0_i32, %c0_i32_0 : i32, i32, i32
  }
  func.func @transform_3(%arg0: i32) -> (i32, i32, i32) {
    %c0_i32 = arith.constant 0 : i32
    %c0_i32_0 = arith.constant 0 : i32
    %c0_i32_1 = arith.constant 0 : i32
    return %arg0, %c0_i32, %c0_i32_0 : i32, i32, i32
  }
  func.func @transform_4(%arg0: i32) -> i32 {
    %c0_i32 = arith.constant 0 : i32
    %c0_i32_0 = arith.constant 0 : i32
    return %c0_i32 : i32
  }
  func.func @transform_5(%arg0: i32) -> i32 {
    %c0_i32 = arith.constant 0 : i32
    %c0_i32_0 = arith.constant 0 : i32
    return %c0_i32 : i32
  }
}

</mosaic_0001>

<llo_original>
// kernel: fixed_loss_gray_forward.3
$region0: #{fixed_loss_gray_forward.3}
  #allocation0 [shape = 'u32[]', space=smem, size = 0x4, offset = 0x4, fixed_abs, tag = 'smem constant byte address 0x4 - core index']
  #allocation1 [shape = 'u32[144,128]{1,0:T(1,128)}', space=vmem, size = 0x12000, scoped, tag = 'internal scratch']
  #allocation2 [shape = 'f32[1]{0:T(128)}', space=smem, size = 0x200, scoped, tag = 'scratch operand']
  %s0 = inlined_call_operand.vmem [shape: f32[2], index: 0, kind: input, shape index: {}]
  %s1 = inlined_call_operand.vmem [shape: f32[2,6,16,16], index: 1, kind: input, shape index: {}]
  %s2 = inlined_call_operand.hbm [shape: f32[6,16,16], index: 2, kind: input, shape index: {}]
  %s3 = inlined_call_operand.hbm [shape: f32[1], index: 3, kind: output, shape index: {}]
  %s4 = sld [smem:[#allocation0]]
  $region61: #{fixed_loss_gray_forward.3} parent=0
    _
  %s6 = ssub.s32 1, %s4
  %s7 = scalar_select 0, %s6, %s4
  $region1: #{fixed_loss_gray_forward.3} parent=0
    #allocation3 [shape = 'u8[512]{0}', space=smem, size = 0x200, scoped, tag = 'input window, operand 0, single buffered']
    #allocation4 [shape = 's32[2]{0}', space=sflag, size = 0x8, scoped, tag = 'scoped memory for fixed_loss_gray_forward.3']
    #allocation5 [shape = 's32[2]{0}', space=sflag, size = 0x8, scoped, tag = 'scoped memory for fixed_loss_gray_forward.3']
    #allocation6 [shape = 's32[2]{0}', space=sflag, size = 0x8, scoped, tag = 'scoped memory for fixed_loss_gray_forward.3']
    #allocation7 [shape = 'u8[16384]{0}', space=vmem, size = 0x4000, scoped, tag = 'input window, operand 2']
    #allocation8 [shape = 'u8[512]{0}', space=smem, size = 0x200, scoped, tag = 'output window, operand 0, single buffered']
    %8 = vsyncpa [#allocation6], 0
    %9 = vsyncpa [#allocation4], 0
    %s10 = scalar_lea.sflag [#allocation4], 1
    %11 = vsyncpa %s10, 0
    %12 = vsyncpa [#allocation5], 0
    loop: start=0, step=1, limit=14
    $region2: #{fixed_loss_gray_forward.3} parent=1 // loop_pre_header
      _
    $region3: #{fixed_loss_gray_forward.3} parent=1 // loop_header
      %s14 = sphi 0, %s18
      %p15 = scmp.ge.s32.totalorder %s14, 14
      %s21 = sphi 0, %s33
      %s22 = sphi 0, %s29
      %s23 = sphi 0, %s21
      %s24 = sphi 0, %s22
      %s25 = sphi 0, %s23
      %s26 = sphi 0, %s24
      %s34 = sphi 0, %s34
      %s36 = sphi 0, %s34
      %s37 = sphi 0, %s36
      %s51 = sphi 0, %s37
      %s59 = sphi 0, %s61
      %s62 = sphi 0, %s59
      %s63 = sphi 0, %s62
      %s79 = sphi 0, %s63
      %s85 = sphi 0, %s87
      %s88 = sphi 0, %s85
      %s89 = sphi 0, %s88
      %s105 = sphi 0, %s89
      %s109 = sphi 0, %s109
      %s111 = sphi 0, %s109
      %s112 = sphi 0, %s111
      %s126 = sphi 0, %s112
    $region4: #{fixed_loss_gray_forward.3} parent=1 // loop_header_branch
      %17 = sbr.rel (%p15) target = $region8
    $region5: #{fixed_loss_gray_forward.3} parent=1 // loop_body
      %s19 = ssub.s32 %s14, 1
      %s20 = ssub.s32 %s14, 2
      %s27 = sadd.s32 1, %s22
      %p28 = scmp.ge.s32.totalorder %s27, 6
      %s29 = scalar_select %p28, 0, %s27
      %s30 = sadd.s32 1, %s21
      %s31 = scalar_select %p28, %s30, %s21
      %p32 = scmp.ge.s32.totalorder %s31, 2
      %s33 = scalar_select %p32, 0, %s31
      %s35 = sadd.s32 %s34, 1
      %p38 = scmp.eq.s32.totalorder %s14, 11
      %p39 = scmp.ne.s32.totalorder %s34, %s36
      %p40 = scmp.eq.s32.totalorder %s14, 0
      %p41 = por %p39, %p40
      %p42 = scmp.ne.s32.totalorder %s34, %s36
      %p43 = scmp.eq.s32.totalorder %s19, 11
      %p44 = por %p42, %p43
      %p45 = scmp.ne.s32.totalorder %s36, %s37
      %p46 = scmp.eq.s32.totalorder %s19, 0
      %p47 = por %p45, %p46
      %p48 = scmp.ne.s32.totalorder %s36, %s37
      %p49 = scmp.eq.s32.totalorder %s20, 11
      %p50 = por %p48, %p49
      %p52 = scmp.ne.s32.totalorder %s37, %s51
      %p53 = scmp.eq.s32.totalorder %s20, 0
      %p54 = por %p52, %p53
      %s55 = ssub.s32 %s21, %s33
      %s56 = ssub.s32 %s22, %s29
      %s57 = sor.u32 %s55, %s56
      %p58 = scmp.eq.s32.totalorder %s57, 0
      %s60 = sadd.s32 %s59, 1
      %s61 = scalar_select %p58, %s59, %s60
      %p64 = pneg %p58
      %p65 = scmp.eq.s32.totalorder %s14, 11
      %p66 = por %p64, %p65
      %p67 = scmp.ne.s32.totalorder %s59, %s62
      %p68 = scmp.eq.s32.totalorder %s14, 0
      %p69 = por %p67, %p68
      %p70 = scmp.ne.s32.totalorder %s59, %s62
      %p71 = scmp.eq.s32.totalorder %s19, 11
      %p72 = por %p70, %p71
      %p73 = scmp.ne.s32.totalorder %s62, %s63
      %p74 = scmp.eq.s32.totalorder %s19, 0
      %p75 = por %p73, %p74
      %p76 = scmp.ne.s32.totalorder %s62, %s63
      %p77 = scmp.eq.s32.totalorder %s20, 11
      %p78 = por %p76, %p77
      %p80 = scmp.ne.s32.totalorder %s63, %s79
      %p81 = scmp.eq.s32.totalorder %s20, 0
      %p82 = por %p80, %p81
      %s83 = ssub.s32 %s22, %s29
      %p84 = scmp.eq.s32.totalorder %s83, 0
      %s86 = sadd.s32 %s85, 1
      %s87 = scalar_select %p84, %s85, %s86
      %p90 = pneg %p84
      %p91 = scmp.eq.s32.totalorder %s14, 11
      %p92 = por %p90, %p91
      %p93 = scmp.ne.s32.totalorder %s85, %s88
      %p94 = scmp.eq.s32.totalorder %s14, 0
      %p95 = por %p93, %p94
      %p96 = scmp.ne.s32.totalorder %s85, %s88
      %p97 = scmp.eq.s32.totalorder %s19, 11
      %p98 = por %p96, %p97
      %p99 = scmp.ne.s32.totalorder %s88, %s89
      %p100 = scmp.eq.s32.totalorder %s19, 0
      %p101 = por %p99, %p100
      %p102 = scmp.ne.s32.totalorder %s88, %s89
      %p103 = scmp.eq.s32.totalorder %s20, 11
      %p104 = por %p102, %p103
      %p106 = scmp.ne.s32.totalorder %s89, %s105
      %p107 = scmp.eq.s32.totalorder %s20, 0
      %p108 = por %p106, %p107
      %s110 = sadd.s32 %s109, 1
      %p113 = scmp.eq.s32.totalorder %s14, 11
      %p114 = scmp.ne.s32.totalorder %s109, %s111
      %p115 = scmp.eq.s32.totalorder %s14, 0
      %p116 = por %p114, %p115
      %p117 = scmp.ne.s32.totalorder %s109, %s111
      %p118 = scmp.eq.s32.totalorder %s19, 11
      %p119 = por %p117, %p118
      %p120 = scmp.ne.s32.totalorder %s111, %s112
      %p121 = scmp.eq.s32.totalorder %s19, 0
      %p122 = por %p120, %p121
      %p123 = scmp.ne.s32.totalorder %s111, %s112
      %p124 = scmp.eq.s32.totalorder %s20, 11
      %p125 = por %p123, %p124
      %p127 = scmp.ne.s32.totalorder %s112, %s126
      %p128 = scmp.eq.s32.totalorder %s20, 0
      %p129 = por %p127, %p128
      %p130 = scmp.le.s32.totalorder 1, %s14
      %p131 = scmp.lt.s32.totalorder %s14, 13
      %p132 = pnand %p130, %p131
      %p133 = pneg %p132
      // Predicated region
      $region9: #{fixed_loss_gray_forward.3} parent=5 // pred_check
        _
      $region10: #{fixed_loss_gray_forward.3} parent=5 // pred_check_branch
        %135 = sbr.rel (%p132) target = $region12
      $region11: #{fixed_loss_gray_forward.3} parent=5 // pred_region
        %s136 = ssub.s32 %s14, 1
        // Predicated region
        $region13: #{fixed_loss_gray_forward.3} parent=11 // pred_check
          %p137 = pneg %p47
        $region14: #{fixed_loss_gray_forward.3} parent=11 // pred_check_branch
          %139 = sbr.rel (%p137) target = $region16
        $region15: #{fixed_loss_gray_forward.3} parent=11 // pred_region
          %s141 = ssub.s32 16, 16
          %142 = vsyncadd [#allocation6], %s141
          %s144 = sshll.u32 %s0, 4
          %s145 = int_to_ptr.vmem [resolvable:$true] %s144
          %147 = dma.vmem_to_smem %s145, 16, [#allocation3], [#allocation6]
        $region16: #{fixed_loss_gray_forward.3} parent=11 // pred_fallthru
          _
      $region12: #{fixed_loss_gray_forward.3} parent=5 // pred_fallthru
        _
      %p148 = scmp.lt.s32.totalorder %s14, 12
      // Predicated region
      $region17: #{fixed_loss_gray_forward.3} parent=5 // pred_check
        %p149 = pneg %p148
      $region18: #{fixed_loss_gray_forward.3} parent=5 // pred_check_branch
        %151 = sbr.rel (%p149) target = $region20
      $region19: #{fixed_loss_gray_forward.3} parent=5 // pred_region
        // Predicated region
        $region21: #{fixed_loss_gray_forward.3} parent=19 // pred_check
          %p152 = pneg %p69
        $region22: #{fixed_loss_gray_forward.3} parent=19 // pred_check_branch
          %154 = sbr.rel (%p152) target = $region24
        $region23: #{fixed_loss_gray_forward.3} parent=19 // pred_region
          %p155 = scmp.lt.s32.totalorder %s21, 1
          %s156 = scalar_select %p155, %s21, 1
          %p157 = scmp.lt.s32.totalorder %s22, 5
          %s158 = scalar_select %p157, %s22, 5
          %s159 = smul.addr %s158, 2
          %s160 = smul.addr %s156, 12
          %s161 = sadd.s32 %s159, %s160
          %s162 = smul.addr %s161, 8
          %s163 = scalar_lea.vmem %s1, %s162
        $region24: #{fixed_loss_gray_forward.3} parent=19 // pred_fallthru
          _
        // Predicated region
        $region25: #{fixed_loss_gray_forward.3} parent=19 // pred_check
          %p164 = pneg %p95
        $region26: #{fixed_loss_gray_forward.3} parent=19 // pred_check_branch
          %166 = sbr.rel (%p164) target = $region28
        $region27: #{fixed_loss_gray_forward.3} parent=19 // pred_region
          %s167 = sand.u32 %s85, 1
          %s168 = scalar_lea.sflag [#allocation4], %s167
          %s169 = sand.u32 %s85, 1
          %s170 = smul.addr %s169, 16
          %s171 = scalar_lea.vmem [#allocation7], %s170
          %s173 = ssub.s32 256, 256
          %174 = vsyncadd %s168, %s173
          %s175 = smul.addr %s22, 2
          %s176 = smul.addr %s175, 128
          %s177 = scalar_lea.hbm %s2, %s176
          %s178 = sshll.u32 %s171, 4
          %s179 = int_to_ptr.vmem [resolvable:$true] %s178
          %184 = dma.hbm_to_vmem [thread:$0]  %s177, 256, %s179, %s168, 128, 128, 8
        $region28: #{fixed_loss_gray_forward.3} parent=19 // pred_fallthru
          _
      $region20: #{fixed_loss_gray_forward.3} parent=5 // pred_fallthru
        _
      %p185 = scmp.le.s32.totalorder 1, %s14
      %p186 = scmp.lt.s32.totalorder %s14, 13
      %p187 = pnand %p185, %p186
      %p188 = pneg %p187
      // Predicated region
      $region29: #{fixed_loss_gray_forward.3} parent=5 // pred_check
        _
      $region30: #{fixed_loss_gray_forward.3} parent=5 // pred_check_branch
        %190 = sbr.rel (%p187) target = $region32
      $region31: #{fixed_loss_gray_forward.3} parent=5 // pred_region
        %s191 = ssub.s32 %s14, 1
        // Predicated region
        $region33: #{fixed_loss_gray_forward.3} parent=31 // pred_check
          %p192 = pneg %p47
        $region34: #{fixed_loss_gray_forward.3} parent=31 // pred_check_branch
          %194 = sbr.rel (%p192) target = $region36
        $region35: #{fixed_loss_gray_forward.3} parent=31 // pred_region
          %195 = dma.done [#allocation6], 16
        $region36: #{fixed_loss_gray_forward.3} parent=31 // pred_fallthru
          _
        %s196 = sand.u32 %s88, 1
        %s197 = scalar_lea.sflag [#allocation4], %s196
        %s198 = sand.u32 %s88, 1
        %s199 = smul.addr %s198, 16
        %s200 = scalar_lea.vmem [#allocation7], %s199
        // Predicated region
        $region37: #{fixed_loss_gray_forward.3} parent=31 // pred_check
          %p201 = pneg %p101
        $region38: #{fixed_loss_gray_forward.3} parent=31 // pred_check_branch
          %203 = sbr.rel (%p201) target = $region40
        $region39: #{fixed_loss_gray_forward.3} parent=31 // pred_region
          %204 = dma.done %s197, 256
        $region40: #{fixed_loss_gray_forward.3} parent=31 // pred_fallthru
          _
        %205 = sfence
        %p206 = pneg %p47
        %p207 = pneg %p44
        %p208 = scmp.lt.s32.totalorder %s23, 1
        %s209 = scalar_select %p208, %s23, 1
        %p210 = scmp.lt.s32.totalorder %s24, 5
        %s211 = scalar_select %p210, %s24, 5
        %s212 = smul.addr %s211, 2
        %s213 = smul.addr %s209, 12
        %s214 = sadd.s32 %s212, %s213
        %s215 = smul.addr %s214, 8
        %s216 = scalar_lea.vmem %s1, %s215
        %p217 = pneg %p75
        %p218 = pneg %p72
        %s219 = sand.u32 %s88, 1
        %s220 = scalar_lea.sflag [#allocation4], %s219
        %s221 = sand.u32 %s88, 1
        %s222 = smul.addr %s221, 16
        %s223 = scalar_lea.vmem [#allocation7], %s222
        %p224 = pneg %p101
        %p225 = pneg %p98
        %p226 = pneg %p122
        %p227 = pneg %p119
        %p228 = scmp.lt.s32.totalorder %s23, 1
        %s229 = scalar_select %p228, %s23, 1
        %p230 = scmp.lt.s32.totalorder %s24, 5
        %s231 = scalar_select %p230, %s24, 5
        %s232 = smul.addr %s231, 2
        %s233 = smul.addr %s229, 12
        %s234 = sadd.s32 %s232, %s233
        %s235 = smul.addr %s234, 8
        %s236 = scalar_lea.vmem %s1, %s235
        %p237 = scmp.eq.s32.totalorder %s23, 0
        %p238 = scmp.eq.s32.totalorder %s24, 0
        %p239 = pnand %p237, %p238
        %p240 = pneg %p239
        // Predicated region
        $region41: #{fixed_loss_gray_forward.3} parent=31 // pred_check
          _
        $region42: #{fixed_loss_gray_forward.3} parent=31 // pred_check_branch
          %242 = sbr.rel (%p239) target = $region44
        $region43: #{fixed_loss_gray_forward.3} parent=31 // pred_region
          %s243 = scalar_lea.smem [#allocation2], 0
          %244 = sst [smem:[%s243]] 0.0
        $region44: #{fixed_loss_gray_forward.3} parent=31 // pred_fallthru
          _
        %v245 = vld [vmem:[%s236] sm:$0xff]
        %v246 = vld [vmem:[%s236 + $0x8] sm:$0xff]
        %v247 = vld [vmem:[%s200] sm:$0xff]
        %v248 = vld [vmem:[%s200 + $0x8] sm:$0xff]
        %v249 = vsub.f32 %v245, %v247
        %v250 = vsub.f32 %v246, %v248
        %v251 = vand.u32 2147483647, %v249
        %v252 = vand.u32 2147483647, %v250
        %vm253 = vcmask 130048
        %v254 = vsel %vm253, %v251, 0.0
        %v255 = vsel %vm253, %v252, 0.0
        %v256 = vadd.f32 %v254, %v255
        %257 = vadd.xlane.f32.xlu0 %v256
        %v258 = vpop.xlane.xlu0 %257
        %v259 = vrot.slane %v258, 4
        %v260 = vadd.f32 %v258, %v259
        %v261 = vrot.slane %v260, 2
        %v262 = vadd.f32 %v260, %v261
        %v263 = vrot.slane %v262, 1
        %v264 = vadd.f32 %v262, %v263
        %s265 = vtos %v264
        %s266 = sld [smem:[#allocation2]]
        %s267 = sld [smem:[#allocation3 + %s23]]
        %s268 = smul.f32 %s267, %s265
        %s269 = sadd.f32 %s266, %s268
        %s270 = scalar_lea.smem [#allocation2], 0
        %271 = sst [smem:[%s270]] %s269
        %p272 = scmp.eq.s32.totalorder %s23, 1
        %p273 = scmp.eq.s32.totalorder %s24, 5
        %p274 = pnand %p272, %p273
        %p275 = pneg %p274
        // Predicated region
        $region45: #{fixed_loss_gray_forward.3} parent=31 // pred_check
          _
        $region46: #{fixed_loss_gray_forward.3} parent=31 // pred_check_branch
          %277 = sbr.rel (%p274) target = $region48
        $region47: #{fixed_loss_gray_forward.3} parent=31 // pred_region
          %s278 = sld [smem:[#allocation2]]
          %s279 = scalar_lea.smem [#allocation8], 0
          %280 = sst [smem:[%s279]] %s278
        $region48: #{fixed_loss_gray_forward.3} parent=31 // pred_fallthru
          _
        // Predicated region
        $region49: #{fixed_loss_gray_forward.3} parent=31 // pred_check
          %p281 = pneg %p119
        $region50: #{fixed_loss_gray_forward.3} parent=31 // pred_check_branch
          %283 = sbr.rel (%p281) target = $region52
        $region51: #{fixed_loss_gray_forward.3} parent=31 // pred_region
          %s285 = ssub.s32 16, 16
          %286 = vsyncadd [#allocation5], %s285
          %289 = dma.smem_to_hbm [#allocation8], 16, %s3, [#allocation5]
        $region52: #{fixed_loss_gray_forward.3} parent=31 // pred_fallthru
          _
        // Predicated region
        $region53: #{fixed_loss_gray_forward.3} parent=31 // pred_check
          %p290 = pneg %p119
        $region54: #{fixed_loss_gray_forward.3} parent=31 // pred_check_branch
          %292 = sbr.rel (%p290) target = $region56
        $region55: #{fixed_loss_gray_forward.3} parent=31 // pred_region
          %293 = dma.done [#allocation5], 16
        $region56: #{fixed_loss_gray_forward.3} parent=31 // pred_fallthru
          _
        %294 = sfence
      $region32: #{fixed_loss_gray_forward.3} parent=5 // pred_fallthru
        _
      %p295 = scmp.le.s32.totalorder 2, %s14
      // Predicated region
      $region57: #{fixed_loss_gray_forward.3} parent=5 // pred_check
        %p296 = pneg %p295
      $region58: #{fixed_loss_gray_forward.3} parent=5 // pred_check_branch
        %298 = sbr.rel (%p296) target = $region60
      $region59: #{fixed_loss_gray_forward.3} parent=5 // pred_region
        %s299 = ssub.s32 %s14, 2
      $region60: #{fixed_loss_gray_forward.3} parent=5 // pred_fallthru
        _
    $region6: #{fixed_loss_gray_forward.3} parent=1 // loop_footer
      %s18 = sadd.s32 1, %s14
    $region7: #{fixed_loss_gray_forward.3} parent=1 // loop_footer_branch
      %13 = sbr.rel target = $region3
    $region8: #{fixed_loss_gray_forward.3} parent=1 // loop_exit
      _
    %300 = vsyncpa [#allocation4], 1
    %s301 = scalar_lea.sflag [#allocation4], 1
    %302 = vsyncpa %s301, 1
    %303 = vsyncpa [#allocation5], 1
    %s304 = scalar_lea.sflag [#allocation5], 1
    %305 = vsyncpa %s304, 1
    %306 = vsyncpa [#allocation6], 1
    %s307 = scalar_lea.sflag [#allocation6], 1
    %308 = vsyncpa %s307, 1

// kernel: fixed_loss_gray_forward.2
$region0: #{fixed_loss_gray_forward.2}
  #allocation0 [shape = 'u32[]', space=smem, size = 0x4, offset = 0x4, fixed_abs, tag = 'smem constant byte address 0x4 - core index']
  #allocation1 [shape = 'u32[144,128]{1,0:T(1,128)}', space=vmem, size = 0x12000, scoped, tag = 'internal scratch']
  #allocation2 [shape = 'f32[2]{0:T(128)}', space=smem, size = 0x200, scoped, tag = 'scratch operand']
  %s0 = inlined_call_operand.vmem [shape: f32[16,16], index: 0, kind: input, shape index: {}, may-alias: {0,1}]
  %s1 = inlined_call_operand.vmem [shape: f32[16,16], index: 1, kind: input, shape index: {}, may-alias: {0,1}]
  %s2 = inlined_call_operand.hbm [shape: f32[6,16,16], index: 2, kind: input, shape index: {}]
  %s3 = inlined_call_operand.hbm [shape: f32[6,16,16], index: 3, kind: input, shape index: {}]
  %s4 = inlined_call_operand.hbm [shape: f32[1], index: 4, kind: output, shape index: {0}]
  %s5 = inlined_call_operand.hbm [shape: f32[1], index: 5, kind: output, shape index: {1}]
  %6 = xla_tuple %s4, %s5
  %s7 = sld [smem:[#allocation0]]
  $region73: #{fixed_loss_gray_forward.2} parent=0
    _
  %s9 = ssub.s32 1, %s7
  %s10 = scalar_select 0, %s9, %s7
  $region1: #{fixed_loss_gray_forward.2} parent=0
    #allocation3 [shape = 'u8[16384]{0}', space=vmem, size = 0x4000, scoped, tag = 'input window, operand 2']
    #allocation4 [shape = 's32[2]{0}', space=sflag, size = 0x8, scoped, tag = 'scoped memory for fixed_loss_gray_forward.2']
    #allocation5 [shape = 's32[2]{0}', space=sflag, size = 0x8, scoped, tag = 'scoped memory for fixed_loss_gray_forward.2']
    #allocation6 [shape = 'u8[16384]{0}', space=vmem, size = 0x4000, scoped, tag = 'input window, operand 3']
    #allocation7 [shape = 's32[2]{0}', space=sflag, size = 0x8, scoped, tag = 'scoped memory for fixed_loss_gray_forward.2']
    #allocation8 [shape = 'u8[512]{0}', space=smem, size = 0x200, scoped, tag = 'output window, operand 0, single buffered']
    #allocation9 [shape = 'u8[512]{0}', space=smem, size = 0x200, scoped, tag = 'output window, operand 1, single buffered']
    #allocation10 [shape = 's32[1]{0}', space=sflag, size = 0x4, scoped, tag = 'scoped memory for fixed_loss_gray_forward.2']
    %11 = vsyncpa [#allocation4], 0
    %s12 = scalar_lea.sflag [#allocation4], 1
    %13 = vsyncpa %s12, 0
    %14 = vsyncpa [#allocation7], 0
    %s15 = scalar_lea.sflag [#allocation7], 1
    %16 = vsyncpa %s15, 0
    %17 = vsyncpa [#allocation5], 0
    %18 = vsyncpa [#allocation10], 0
    loop: start=0, step=1, limit=8
    $region2: #{fixed_loss_gray_forward.2} parent=1 // loop_pre_header
      _
    $region3: #{fixed_loss_gray_forward.2} parent=1 // loop_header
      %s20 = sphi 0, %s24
      %p21 = scmp.ge.s32.totalorder %s20, 8
      %s28 = sphi 0, %s28
      %s30 = sphi 0, %s28
      %s31 = sphi 0, %s30
      %s45 = sphi 0, %s31
      %s49 = sphi 0, %s49
      %s51 = sphi 0, %s49
      %s52 = sphi 0, %s51
      %s66 = sphi 0, %s52
      %s72 = sphi 0, %s74
      %s75 = sphi 0, %s72
      %s76 = sphi 0, %s75
      %s92 = sphi 0, %s76
      %s98 = sphi 0, %s100
      %s101 = sphi 0, %s98
      %s102 = sphi 0, %s101
      %s118 = sphi 0, %s102
      %s122 = sphi 0, %s122
      %s124 = sphi 0, %s122
      %s125 = sphi 0, %s124
      %s139 = sphi 0, %s125
      %s143 = sphi 0, %s143
      %s145 = sphi 0, %s143
      %s146 = sphi 0, %s145
      %s160 = sphi 0, %s146
    $region4: #{fixed_loss_gray_forward.2} parent=1 // loop_header_branch
      %23 = sbr.rel (%p21) target = $region8
    $region5: #{fixed_loss_gray_forward.2} parent=1 // loop_body
      %s25 = ssub.s32 %s20, 1
      %s26 = ssub.s32 %s20, 2
      %s27 = sadd.s32 %s20, 1
      %s29 = sadd.s32 %s28, 1
      %p32 = scmp.eq.s32.totalorder %s20, 5
      %p33 = scmp.ne.s32.totalorder %s28, %s30
      %p34 = scmp.eq.s32.totalorder %s20, 0
      %p35 = por %p33, %p34
      %p36 = scmp.ne.s32.totalorder %s28, %s30
      %p37 = scmp.eq.s32.totalorder %s25, 5
      %p38 = por %p36, %p37
      %p39 = scmp.ne.s32.totalorder %s30, %s31
      %p40 = scmp.eq.s32.totalorder %s25, 0
      %p41 = por %p39, %p40
      %p42 = scmp.ne.s32.totalorder %s30, %s31
      %p43 = scmp.eq.s32.totalorder %s26, 5
      %p44 = por %p42, %p43
      %p46 = scmp.ne.s32.totalorder %s31, %s45
      %p47 = scmp.eq.s32.totalorder %s26, 0
      %p48 = por %p46, %p47
      %s50 = sadd.s32 %s49, 1
      %p53 = scmp.eq.s32.totalorder %s20, 5
      %p54 = scmp.ne.s32.totalorder %s49, %s51
      %p55 = scmp.eq.s32.totalorder %s20, 0
      %p56 = por %p54, %p55
      %p57 = scmp.ne.s32.totalorder %s49, %s51
      %p58 = scmp.eq.s32.totalorder %s25, 5
      %p59 = por %p57, %p58
      %p60 = scmp.ne.s32.totalorder %s51, %s52
      %p61 = scmp.eq.s32.totalorder %s25, 0
      %p62 = por %p60, %p61
      %p63 = scmp.ne.s32.totalorder %s51, %s52
      %p64 = scmp.eq.s32.totalorder %s26, 5
      %p65 = por %p63, %p64
      %p67 = scmp.ne.s32.totalorder %s52, %s66
      %p68 = scmp.eq.s32.totalorder %s26, 0
      %p69 = por %p67, %p68
      %s70 = ssub.s32 %s20, %s27
      %p71 = scmp.eq.s32.totalorder %s70, 0
      %s73 = sadd.s32 %s72, 1
      %s74 = scalar_select %p71, %s72, %s73
      %p77 = pneg %p71
      %p78 = scmp.eq.s32.totalorder %s20, 5
      %p79 = por %p77, %p78
      %p80 = scmp.ne.s32.totalorder %s72, %s75
      %p81 = scmp.eq.s32.totalorder %s20, 0
      %p82 = por %p80, %p81
      %p83 = scmp.ne.s32.totalorder %s72, %s75
      %p84 = scmp.eq.s32.totalorder %s25, 5
      %p85 = por %p83, %p84
      %p86 = scmp.ne.s32.totalorder %s75, %s76
      %p87 = scmp.eq.s32.totalorder %s25, 0
      %p88 = por %p86, %p87
      %p89 = scmp.ne.s32.totalorder %s75, %s76
      %p90 = scmp.eq.s32.totalorder %s26, 5
      %p91 = por %p89, %p90
      %p93 = scmp.ne.s32.totalorder %s76, %s92
      %p94 = scmp.eq.s32.totalorder %s26, 0
      %p95 = por %p93, %p94
      %s96 = ssub.s32 %s20, %s27
      %p97 = scmp.eq.s32.totalorder %s96, 0
      %s99 = sadd.s32 %s98, 1
      %s100 = scalar_select %p97, %s98, %s99
      %p103 = pneg %p97
      %p104 = scmp.eq.s32.totalorder %s20, 5
      %p105 = por %p103, %p104
      %p106 = scmp.ne.s32.totalorder %s98, %s101
      %p107 = scmp.eq.s32.totalorder %s20, 0
      %p108 = por %p106, %p107
      %p109 = scmp.ne.s32.totalorder %s98, %s101
      %p110 = scmp.eq.s32.totalorder %s25, 5
      %p111 = por %p109, %p110
      %p112 = scmp.ne.s32.totalorder %s101, %s102
      %p113 = scmp.eq.s32.totalorder %s25, 0
      %p114 = por %p112, %p113
      %p115 = scmp.ne.s32.totalorder %s101, %s102
      %p116 = scmp.eq.s32.totalorder %s26, 5
      %p117 = por %p115, %p116
      %p119 = scmp.ne.s32.totalorder %s102, %s118
      %p120 = scmp.eq.s32.totalorder %s26, 0
      %p121 = por %p119, %p120
      %s123 = sadd.s32 %s122, 1
      %p126 = scmp.eq.s32.totalorder %s20, 5
      %p127 = scmp.ne.s32.totalorder %s122, %s124
      %p128 = scmp.eq.s32.totalorder %s20, 0
      %p129 = por %p127, %p128
      %p130 = scmp.ne.s32.totalorder %s122, %s124
      %p131 = scmp.eq.s32.totalorder %s25, 5
      %p132 = por %p130, %p131
      %p133 = scmp.ne.s32.totalorder %s124, %s125
      %p134 = scmp.eq.s32.totalorder %s25, 0
      %p135 = por %p133, %p134
      %p136 = scmp.ne.s32.totalorder %s124, %s125
      %p137 = scmp.eq.s32.totalorder %s26, 5
      %p138 = por %p136, %p137
      %p140 = scmp.ne.s32.totalorder %s125, %s139
      %p141 = scmp.eq.s32.totalorder %s26, 0
      %p142 = por %p140, %p141
      %s144 = sadd.s32 %s143, 1
      %p147 = scmp.eq.s32.totalorder %s20, 5
      %p148 = scmp.ne.s32.totalorder %s143, %s145
      %p149 = scmp.eq.s32.totalorder %s20, 0
      %p150 = por %p148, %p149
      %p151 = scmp.ne.s32.totalorder %s143, %s145
      %p152 = scmp.eq.s32.totalorder %s25, 5
      %p153 = por %p151, %p152
      %p154 = scmp.ne.s32.totalorder %s145, %s146
      %p155 = scmp.eq.s32.totalorder %s25, 0
      %p156 = por %p154, %p155
      %p157 = scmp.ne.s32.totalorder %s145, %s146
      %p158 = scmp.eq.s32.totalorder %s26, 5
      %p159 = por %p157, %p158
      %p161 = scmp.ne.s32.totalorder %s146, %s160
      %p162 = scmp.eq.s32.totalorder %s26, 0
      %p163 = por %p161, %p162
      %p164 = scmp.le.s32.totalorder 1, %s20
      %p165 = scmp.lt.s32.totalorder %s20, 7
      %p166 = pnand %p164, %p165
      %p167 = pneg %p166
      // Predicated region
      $region9: #{fixed_loss_gray_forward.2} parent=5 // pred_check
        _
      $region10: #{fixed_loss_gray_forward.2} parent=5 // pred_check_branch
        %169 = sbr.rel (%p166) target = $region12
      $region11: #{fixed_loss_gray_forward.2} parent=5 // pred_region
        %s170 = ssub.s32 %s20, 1
        // Predicated region
        $region13: #{fixed_loss_gray_forward.2} parent=11 // pred_check
          %p171 = pneg %p41
        $region14: #{fixed_loss_gray_forward.2} parent=11 // pred_check_branch
          %173 = sbr.rel (%p171) target = $region16
        $region15: #{fixed_loss_gray_forward.2} parent=11 // pred_region
          _
        $region16: #{fixed_loss_gray_forward.2} parent=11 // pred_fallthru
          _
        // Predicated region
        $region17: #{fixed_loss_gray_forward.2} parent=11 // pred_check
          %p174 = pneg %p62
        $region18: #{fixed_loss_gray_forward.2} parent=11 // pred_check_branch
          %176 = sbr.rel (%p174) target = $region20
        $region19: #{fixed_loss_gray_forward.2} parent=11 // pred_region
          _
        $region20: #{fixed_loss_gray_forward.2} parent=11 // pred_fallthru
          _
      $region12: #{fixed_loss_gray_forward.2} parent=5 // pred_fallthru
        _
      %p177 = scmp.lt.s32.totalorder %s20, 6
      // Predicated region
      $region21: #{fixed_loss_gray_forward.2} parent=5 // pred_check
        %p178 = pneg %p177
      $region22: #{fixed_loss_gray_forward.2} parent=5 // pred_check_branch
        %180 = sbr.rel (%p178) target = $region24
      $region23: #{fixed_loss_gray_forward.2} parent=5 // pred_region
        // Predicated region
        $region25: #{fixed_loss_gray_forward.2} parent=23 // pred_check
          %p181 = pneg %p82
        $region26: #{fixed_loss_gray_forward.2} parent=23 // pred_check_branch
          %183 = sbr.rel (%p181) target = $region28
        $region27: #{fixed_loss_gray_forward.2} parent=23 // pred_region
          %s184 = sand.u32 %s72, 1
          %s185 = scalar_lea.sflag [#allocation4], %s184
          %s186 = sand.u32 %s72, 1
          %s187 = smul.addr %s186, 16
          %s188 = scalar_lea.vmem [#allocation3], %s187
          %s190 = ssub.s32 256, 256
          %191 = vsyncadd %s185, %s190
          %s192 = smul.addr %s20, 2
          %s193 = smul.addr %s192, 128
          %s194 = scalar_lea.hbm %s2, %s193
          %s195 = sshll.u32 %s188, 4
          %s196 = int_to_ptr.vmem [resolvable:$true] %s195
          %201 = dma.hbm_to_vmem [thread:$0]  %s194, 256, %s196, %s185, 128, 128, 8
        $region28: #{fixed_loss_gray_forward.2} parent=23 // pred_fallthru
          _
        // Predicated region
        $region29: #{fixed_loss_gray_forward.2} parent=23 // pred_check
          %p202 = pneg %p108
        $region30: #{fixed_loss_gray_forward.2} parent=23 // pred_check_branch
          %204 = sbr.rel (%p202) target = $region32
        $region31: #{fixed_loss_gray_forward.2} parent=23 // pred_region
          %s205 = sand.u32 %s98, 1
          %s206 = scalar_lea.sflag [#allocation7], %s205
          %s207 = sand.u32 %s98, 1
          %s208 = smul.addr %s207, 16
          %s209 = scalar_lea.vmem [#allocation6], %s208
          %s211 = ssub.s32 256, 256
          %212 = vsyncadd %s206, %s211
          %s213 = smul.addr %s20, 2
          %s214 = smul.addr %s213, 128
          %s215 = scalar_lea.hbm %s3, %s214
          %s216 = sshll.u32 %s209, 4
          %s217 = int_to_ptr.vmem [resolvable:$true] %s216
          %222 = dma.hbm_to_vmem [thread:$0]  %s215, 256, %s217, %s206, 128, 128, 8
        $region32: #{fixed_loss_gray_forward.2} parent=23 // pred_fallthru
          _
      $region24: #{fixed_loss_gray_forward.2} parent=5 // pred_fallthru
        _
      %p223 = scmp.le.s32.totalorder 1, %s20
      %p224 = scmp.lt.s32.totalorder %s20, 7
      %p225 = pnand %p223, %p224
      %p226 = pneg %p225
      // Predicated region
      $region33: #{fixed_loss_gray_forward.2} parent=5 // pred_check
        _
      $region34: #{fixed_loss_gray_forward.2} parent=5 // pred_check_branch
        %228 = sbr.rel (%p225) target = $region36
      $region35: #{fixed_loss_gray_forward.2} parent=5 // pred_region
        %s229 = ssub.s32 %s20, 1
        %s230 = sand.u32 %s75, 1
        %s231 = scalar_lea.sflag [#allocation4], %s230
        %s232 = sand.u32 %s75, 1
        %s233 = smul.addr %s232, 16
        %s234 = scalar_lea.vmem [#allocation3], %s233
        // Predicated region
        $region37: #{fixed_loss_gray_forward.2} parent=35 // pred_check
          %p235 = pneg %p88
        $region38: #{fixed_loss_gray_forward.2} parent=35 // pred_check_branch
          %237 = sbr.rel (%p235) target = $region40
        $region39: #{fixed_loss_gray_forward.2} parent=35 // pred_region
          %238 = dma.done %s231, 256
        $region40: #{fixed_loss_gray_forward.2} parent=35 // pred_fallthru
          _
        %s239 = sand.u32 %s101, 1
        %s240 = scalar_lea.sflag [#allocation7], %s239
        %s241 = sand.u32 %s101, 1
        %s242 = smul.addr %s241, 16
        %s243 = scalar_lea.vmem [#allocation6], %s242
        // Predicated region
        $region41: #{fixed_loss_gray_forward.2} parent=35 // pred_check
          %p244 = pneg %p114
        $region42: #{fixed_loss_gray_forward.2} parent=35 // pred_check_branch
          %246 = sbr.rel (%p244) target = $region44
        $region43: #{fixed_loss_gray_forward.2} parent=35 // pred_region
          %247 = dma.done %s240, 256
        $region44: #{fixed_loss_gray_forward.2} parent=35 // pred_fallthru
          _
        %p248 = pneg %p41
        %p249 = pneg %p38
        %p250 = pneg %p62
        %p251 = pneg %p59
        %s252 = sand.u32 %s75, 1
        %s253 = scalar_lea.sflag [#allocation4], %s252
        %s254 = sand.u32 %s75, 1
        %s255 = smul.addr %s254, 16
        %s256 = scalar_lea.vmem [#allocation3], %s255
        %p257 = pneg %p88
        %p258 = pneg %p85
        %s259 = sand.u32 %s101, 1
        %s260 = scalar_lea.sflag [#allocation7], %s259
        %s261 = sand.u32 %s101, 1
        %s262 = smul.addr %s261, 16
        %s263 = scalar_lea.vmem [#allocation6], %s262
        %p264 = pneg %p114
        %p265 = pneg %p111
        %p266 = pneg %p135
        %p267 = pneg %p132
        %p268 = pneg %p156
        %p269 = pneg %p153
        %p270 = scmp.eq.s32.totalorder %s25, 0
        // Predicated region
        $region45: #{fixed_loss_gray_forward.2} parent=35 // pred_check
          %p271 = pneg %p270
        $region46: #{fixed_loss_gray_forward.2} parent=35 // pred_check_branch
          %273 = sbr.rel (%p271) target = $region48
        $region47: #{fixed_loss_gray_forward.2} parent=35 // pred_region
          %s274 = scalar_lea.smem [#allocation2], 0
          %275 = sst [smem:[%s274]] 0.0
          %s276 = scalar_lea.smem [#allocation2], 1
          %277 = sst [smem:[%s276]] 0.0
        $region48: #{fixed_loss_gray_forward.2} parent=35 // pred_fallthru
          _
        %v278 = vld [vmem:[%s234] sm:$0xff]
        %v279 = vld [vmem:[%s234 + $0x8] sm:$0xff]
        %v280 = vld [vmem:[%s243] sm:$0xff]
        %v281 = vld [vmem:[%s243 + $0x8] sm:$0xff]
        %v282 = vld [vmem:[%s0] sm:$0xff]
        %v283 = vld [vmem:[%s0 + $0x8] sm:$0xff]
        %v284 = vld [vmem:[%s1] sm:$0xff]
        %v285 = vld [vmem:[%s1 + $0x8] sm:$0xff]
        %vm286 = vcmask 130048
        %v288 = vsel %vm286, %v282, 0
        %v291 = vsel %vm286, %v283, 0
        %293 = vmatprep.subr.mxu0 0.0
        %294 = vmatpush1.msra.mxu0 %v278
        %295 = vmatprep.subr.mxu0 0.0
        %296 = vmatpush1.msra.mxu0 %v279
        %297 = vmatprep.subr.mxu0 0.0
        %298 = vmatpush1.msra.mxu0 0.0
        %299 = vmatprep.subr.mxu0 0.0
        %300 = vmatpush1.msra.mxu0 0.0
        %301 = vmatprep.subr.mxu0 0.0
        %302 = vmatpush1.msra.mxu0 0.0
        %303 = vmatprep.subr.mxu0 0.0
        %304 = vmatpush1.msra.mxu0 0.0
        %305 = vmatprep.subr.mxu0 0.0
        %306 = vmatpush1.msra.mxu0 0.0
        %307 = vmatprep.subr.mxu0 0.0
        %308 = vmatpush1.msra.mxu0 0.0
        %309 = vmatprep.subr.mxu0 0.0
        %310 = vmatpush1.msra.mxu0 0.0
        %311 = vmatprep.subr.mxu0 0.0
        %312 = vmatpush1.msra.mxu0 0.0
        %313 = vmatprep.subr.mxu0 0.0
        %314 = vmatpush1.msra.mxu0 0.0
        %315 = vmatprep.subr.mxu0 0.0
        %316 = vmatpush1.msra.mxu0 0.0
        %317 = vmatprep.subr.mxu0 0.0
        %318 = vmatpush1.msra.mxu0 0.0
        %319 = vmatprep.subr.mxu0 0.0
        %320 = vmatpush1.msra.mxu0 0.0
        %321 = vmatprep.subr.mxu0 0.0
        %322 = vmatpush1.msra.mxu0 0.0
        %323 = vmatprep.subr.mxu0 0.0
        %324 = vmatpush1.msra.mxu0 0.0
        %325 = vmatprep.subr.mxu0 0.0
        %326 = vmatpush1.msra.mxu0 0.0
        %327 = vmatprep.subr.mxu0 0.0
        %328 = vmatpush1.msra.mxu0 0.0
        %329 = vmatprep.subr.mxu0 0.0
        %330 = vmatpush1.msra.mxu0 0.0
        %331 = vmatprep.subr.mxu0 0.0
        %332 = vmatpush1.msra.mxu0 0.0
        %333 = vmatprep.subr.mxu0 0.0
        %334 = vmatpush1.msra.mxu0 0.0
        %335 = vmatprep.subr.mxu0 0.0
        %336 = vmatpush1.msra.mxu0 0.0
        %337 = vmatprep.subr.mxu0 0.0
        %338 = vmatpush1.msra.mxu0 0.0
        %339 = vmatprep.subr.mxu0 0.0
        %340 = vmatpush1.msra.mxu0 0.0
        %341 = vmatprep.subr.mxu0 0.0
        %342 = vmatpush1.msra.mxu0 0.0
        %343 = vmatprep.subr.mxu0 0.0
        %344 = vmatpush1.msra.mxu0 0.0
        %345 = vmatprep.subr.mxu0 0.0
        %346 = vmatpush1.msra.mxu0 0.0
        %347 = vmatprep.subr.mxu0 0.0
        %348 = vmatpush1.msra.mxu0 0.0
        %349 = vmatprep.subr.mxu0 0.0
        %350 = vmatpush1.msra.mxu0 0.0
        %351 = vmatprep.subr.mxu0 0.0
        %352 = vmatpush1.msra.mxu0 0.0
        %353 = vmatprep.subr.mxu0 0.0
        %354 = vmatpush1.msra.mxu0 0.0
        %355 = vmatprep.subr.mxu0 0.0
        %356 = vmatpush1.msra.mxu0 0.0
        %357 = vmatprep.mubr.f32.mxu0 0.0
        %358 = vmatmul.mubr.f32.gmra.mrb[0].mxu0 %v288
        %v359 = vpop.f32.mrb[0].mxu0
        %v360 = vadd.f32 0.0, %v359
        %v361 = vpop.f32.mrb[0].mxu0
        %362 = vmatprep.mubr.f32.mxu0 0.0
        %363 = vmatmul.mubr.f32.gmra.mrb[0].mxu0 %v291
        %v364 = vpop.f32.mrb[0].mxu0
        %v365 = vadd.f32 0.0, %v364
        %v366 = vpop.f32.mrb[0].mxu0
        %367 = vdwg.mxu0
        %v369 = vsel %vm286, %v360, 0
        %v372 = vsel %vm286, %v365, 0
        %374 = vmatprep.subr.mxu0 0.0
        %375 = vmatpush1.msra.mxu0 %v284
        %376 = vmatprep.subr.mxu0 0.0
        %377 = vmatpush1.msra.mxu0 %v285
        %378 = vmatprep.subr.mxu0 0.0
        %379 = vmatpush1.msra.mxu0 0.0
        %380 = vmatprep.subr.mxu0 0.0
        %381 = vmatpush1.msra.mxu0 0.0
        %382 = vmatprep.subr.mxu0 0.0
        %383 = vmatpush1.msra.mxu0 0.0
        %384 = vmatprep.subr.mxu0 0.0
        %385 = vmatpush1.msra.mxu0 0.0
        %386 = vmatprep.subr.mxu0 0.0
        %387 = vmatpush1.msra.mxu0 0.0
        %388 = vmatprep.subr.mxu0 0.0
        %389 = vmatpush1.msra.mxu0 0.0
        %390 = vmatprep.subr.mxu0 0.0
        %391 = vmatpush1.msra.mxu0 0.0
        %392 = vmatprep.subr.mxu0 0.0
        %393 = vmatpush1.msra.mxu0 0.0
        %394 = vmatprep.subr.mxu0 0.0
        %395 = vmatpush1.msra.mxu0 0.0
        %396 = vmatprep.subr.mxu0 0.0
        %397 = vmatpush1.msra.mxu0 0.0
        %398 = vmatprep.subr.mxu0 0.0
        %399 = vmatpush1.msra.mxu0 0.0
        %400 = vmatprep.subr.mxu0 0.0
        %401 = vmatpush1.msra.mxu0 0.0
        %402 = vmatprep.subr.mxu0 0.0
        %403 = vmatpush1.msra.mxu0 0.0
        %404 = vmatprep.subr.mxu0 0.0
        %405 = vmatpush1.msra.mxu0 0.0
        %406 = vmatprep.subr.mxu0 0.0
        %407 = vmatpush1.msra.mxu0 0.0
        %408 = vmatprep.subr.mxu0 0.0
        %409 = vmatpush1.msra.mxu0 0.0
        %410 = vmatprep.subr.mxu0 0.0
        %411 = vmatpush1.msra.mxu0 0.0
        %412 = vmatprep.subr.mxu0 0.0
        %413 = vmatpush1.msra.mxu0 0.0
        %414 = vmatprep.subr.mxu0 0.0
        %415 = vmatpush1.msra.mxu0 0.0
        %416 = vmatprep.subr.mxu0 0.0
        %417 = vmatpush1.msra.mxu0 0.0
        %418 = vmatprep.subr.mxu0 0.0
        %419 = vmatpush1.msra.mxu0 0.0
        %420 = vmatprep.subr.mxu0 0.0
        %421 = vmatpush1.msra.mxu0 0.0
        %422 = vmatprep.subr.mxu0 0.0
        %423 = vmatpush1.msra.mxu0 0.0
        %424 = vmatprep.subr.mxu0 0.0
        %425 = vmatpush1.msra.mxu0 0.0
        %426 = vmatprep.subr.mxu0 0.0
        %427 = vmatpush1.msra.mxu0 0.0
        %428 = vmatprep.subr.mxu0 0.0
        %429 = vmatpush1.msra.mxu0 0.0
        %430 = vmatprep.subr.mxu0 0.0
        %431 = vmatpush1.msra.mxu0 0.0
        %432 = vmatprep.subr.mxu0 0.0
        %433 = vmatpush1.msra.mxu0 0.0
        %434 = vmatprep.subr.mxu0 0.0
        %435 = vmatpush1.msra.mxu0 0.0
        %436 = vmatprep.subr.mxu0 0.0
        %437 = vmatpush1.msra.mxu0 0.0
        %438 = vmatprep.mubr.f32.mxu0 0.0
        %439 = vmatmul.mubr.f32.gmra.mrb[0].mxu0 %v369
        %v440 = vpop.f32.mrb[0].mxu0
        %v441 = vadd.f32 0.0, %v440
        %v442 = vpop.f32.mrb[0].mxu0
        %443 = vmatprep.mubr.f32.mxu0 0.0
        %444 = vmatmul.mubr.f32.gmra.mrb[0].mxu0 %v372
        %v445 = vpop.f32.mrb[0].mxu0
        %v446 = vadd.f32 0.0, %v445
        %v447 = vpop.f32.mrb[0].mxu0
        %448 = vdwg.mxu0
        %449 = vmatprep.subr.mxu0 0.0
        %450 = vmatpush1.msra.mxu0 %v280
        %451 = vmatprep.subr.mxu0 0.0
        %452 = vmatpush1.msra.mxu0 %v281
        %453 = vmatprep.subr.mxu0 0.0
        %454 = vmatpush1.msra.mxu0 0.0
        %455 = vmatprep.subr.mxu0 0.0
        %456 = vmatpush1.msra.mxu0 0.0
        %457 = vmatprep.subr.mxu0 0.0
        %458 = vmatpush1.msra.mxu0 0.0
        %459 = vmatprep.subr.mxu0 0.0
        %460 = vmatpush1.msra.mxu0 0.0
        %461 = vmatprep.subr.mxu0 0.0
        %462 = vmatpush1.msra.mxu0 0.0
        %463 = vmatprep.subr.mxu0 0.0
        %464 = vmatpush1.msra.mxu0 0.0
        %465 = vmatprep.subr.mxu0 0.0
        %466 = vmatpush1.msra.mxu0 0.0
        %467 = vmatprep.subr.mxu0 0.0
        %468 = vmatpush1.msra.mxu0 0.0
        %469 = vmatprep.subr.mxu0 0.0
        %470 = vmatpush1.msra.mxu0 0.0
        %471 = vmatprep.subr.mxu0 0.0
        %472 = vmatpush1.msra.mxu0 0.0
        %473 = vmatprep.subr.mxu0 0.0
        %474 = vmatpush1.msra.mxu0 0.0
        %475 = vmatprep.subr.mxu0 0.0
        %476 = vmatpush1.msra.mxu0 0.0
        %477 = vmatprep.subr.mxu0 0.0
        %478 = vmatpush1.msra.mxu0 0.0
        %479 = vmatprep.subr.mxu0 0.0
        %480 = vmatpush1.msra.mxu0 0.0
        %481 = vmatprep.subr.mxu0 0.0
        %482 = vmatpush1.msra.mxu0 0.0
        %483 = vmatprep.subr.mxu0 0.0
        %484 = vmatpush1.msra.mxu0 0.0
        %485 = vmatprep.subr.mxu0 0.0
        %486 = vmatpush1.msra.mxu0 0.0
        %487 = vmatprep.subr.mxu0 0.0
        %488 = vmatpush1.msra.mxu0 0.0
        %489 = vmatprep.subr.mxu0 0.0
        %490 = vmatpush1.msra.mxu0 0.0
        %491 = vmatprep.subr.mxu0 0.0
        %492 = vmatpush1.msra.mxu0 0.0
        %493 = vmatprep.subr.mxu0 0.0
        %494 = vmatpush1.msra.mxu0 0.0
        %495 = vmatprep.subr.mxu0 0.0
        %496 = vmatpush1.msra.mxu0 0.0
        %497 = vmatprep.subr.mxu0 0.0
        %498 = vmatpush1.msra.mxu0 0.0
        %499 = vmatprep.subr.mxu0 0.0
        %500 = vmatpush1.msra.mxu0 0.0
        %501 = vmatprep.subr.mxu0 0.0
        %502 = vmatpush1.msra.mxu0 0.0
        %503 = vmatprep.subr.mxu0 0.0
        %504 = vmatpush1.msra.mxu0 0.0
        %505 = vmatprep.subr.mxu0 0.0
        %506 = vmatpush1.msra.mxu0 0.0
        %507 = vmatprep.subr.mxu0 0.0
        %508 = vmatpush1.msra.mxu0 0.0
        %509 = vmatprep.subr.mxu0 0.0
        %510 = vmatpush1.msra.mxu0 0.0
        %511 = vmatprep.subr.mxu0 0.0
        %512 = vmatpush1.msra.mxu0 0.0
        %513 = vmatprep.mubr.f32.mxu0 0.0
        %514 = vmatmul.mubr.f32.gmra.mrb[0].mxu0 %v288
        %v515 = vpop.f32.mrb[0].mxu0
        %v516 = vadd.f32 0.0, %v515
        %v517 = vpop.f32.mrb[0].mxu0
        %518 = vmatprep.mubr.f32.mxu0 0.0
        %519 = vmatmul.mubr.f32.gmra.mrb[0].mxu0 %v291
        %v520 = vpop.f32.mrb[0].mxu0
        %v521 = vadd.f32 0.0, %v520
        %v522 = vpop.f32.mrb[0].mxu0
        %523 = vdwg.mxu0
        %v525 = vsel %vm286, %v516, 0
        %v528 = vsel %vm286, %v521, 0
        %530 = vmatprep.subr.mxu0 0.0
        %531 = vmatpush1.msra.mxu0 %v284
        %532 = vmatprep.subr.mxu0 0.0
        %533 = vmatpush1.msra.mxu0 %v285
        %534 = vmatprep.subr.mxu0 0.0
        %535 = vmatpush1.msra.mxu0 0.0
        %536 = vmatprep.subr.mxu0 0.0
        %537 = vmatpush1.msra.mxu0 0.0
        %538 = vmatprep.subr.mxu0 0.0
        %539 = vmatpush1.msra.mxu0 0.0
        %540 = vmatprep.subr.mxu0 0.0
        %541 = vmatpush1.msra.mxu0 0.0
        %542 = vmatprep.subr.mxu0 0.0
        %543 = vmatpush1.msra.mxu0 0.0
        %544 = vmatprep.subr.mxu0 0.0
        %545 = vmatpush1.msra.mxu0 0.0
        %546 = vmatprep.subr.mxu0 0.0
        %547 = vmatpush1.msra.mxu0 0.0
        %548 = vmatprep.subr.mxu0 0.0
        %549 = vmatpush1.msra.mxu0 0.0
        %550 = vmatprep.subr.mxu0 0.0
        %551 = vmatpush1.msra.mxu0 0.0
        %552 = vmatprep.subr.mxu0 0.0
        %553 = vmatpush1.msra.mxu0 0.0
        %554 = vmatprep.subr.mxu0 0.0
        %555 = vmatpush1.msra.mxu0 0.0
        %556 = vmatprep.subr.mxu0 0.0
        %557 = vmatpush1.msra.mxu0 0.0
        %558 = vmatprep.subr.mxu0 0.0
        %559 = vmatpush1.msra.mxu0 0.0
        %560 = vmatprep.subr.mxu0 0.0
        %561 = vmatpush1.msra.mxu0 0.0
        %562 = vmatprep.subr.mxu0 0.0
        %563 = vmatpush1.msra.mxu0 0.0
        %564 = vmatprep.subr.mxu0 0.0
        %565 = vmatpush1.msra.mxu0 0.0
        %566 = vmatprep.subr.mxu0 0.0
        %567 = vmatpush1.msra.mxu0 0.0
        %568 = vmatprep.subr.mxu0 0.0
        %569 = vmatpush1.msra.mxu0 0.0
        %570 = vmatprep.subr.mxu0 0.0
        %571 = vmatpush1.msra.mxu0 0.0
        %572 = vmatprep.subr.mxu0 0.0
        %573 = vmatpush1.msra.mxu0 0.0
        %574 = vmatprep.subr.mxu0 0.0
        %575 = vmatpush1.msra.mxu0 0.0
        %576 = vmatprep.subr.mxu0 0.0
        %577 = vmatpush1.msra.mxu0 0.0
        %578 = vmatprep.subr.mxu0 0.0
        %579 = vmatpush1.msra.mxu0 0.0
        %580 = vmatprep.subr.mxu0 0.0
        %581 = vmatpush1.msra.mxu0 0.0
        %582 = vmatprep.subr.mxu0 0.0
        %583 = vmatpush1.msra.mxu0 0.0
        %584 = vmatprep.subr.mxu0 0.0
        %585 = vmatpush1.msra.mxu0 0.0
        %586 = vmatprep.subr.mxu0 0.0
        %587 = vmatpush1.msra.mxu0 0.0
        %588 = vmatprep.subr.mxu0 0.0
        %589 = vmatpush1.msra.mxu0 0.0
        %590 = vmatprep.subr.mxu0 0.0
        %591 = vmatpush1.msra.mxu0 0.0
        %592 = vmatprep.subr.mxu0 0.0
        %593 = vmatpush1.msra.mxu0 0.0
        %594 = vmatprep.mubr.f32.mxu0 0.0
        %595 = vmatmul.mubr.f32.gmra.mrb[0].mxu0 %v525
        %v596 = vpop.f32.mrb[0].mxu0
        %v597 = vadd.f32 0.0, %v596
        %v598 = vpop.f32.mrb[0].mxu0
        %599 = vmatprep.mubr.f32.mxu0 0.0
        %600 = vmatmul.mubr.f32.gmra.mrb[0].mxu0 %v528
        %v601 = vpop.f32.mrb[0].mxu0
        %v602 = vadd.f32 0.0, %v601
        %v603 = vpop.f32.mrb[0].mxu0
        %604 = vdwg.mxu0
        %v605 = vmul.f32 %v278, %v278
        %v606 = vmul.f32 %v279, %v279
        %607 = vmatprep.subr.mxu0 0.0
        %608 = vmatpush1.msra.mxu0 %v605
        %609 = vmatprep.subr.mxu0 0.0
        %610 = vmatpush1.msra.mxu0 %v606
        %611 = vmatprep.subr.mxu0 0.0
        %612 = vmatpush1.msra.mxu0 0.0
        %613 = vmatprep.subr.mxu0 0.0
        %614 = vmatpush1.msra.mxu0 0.0
        %615 = vmatprep.subr.mxu0 0.0
        %616 = vmatpush1.msra.mxu0 0.0
        %617 = vmatprep.subr.mxu0 0.0
        %618 = vmatpush1.msra.mxu0 0.0
        %619 = vmatprep.subr.mxu0 0.0
        %620 = vmatpush1.msra.mxu0 0.0
        %621 = vmatprep.subr.mxu0 0.0
        %622 = vmatpush1.msra.mxu0 0.0
        %623 = vmatprep.subr.mxu0 0.0
        %624 = vmatpush1.msra.mxu0 0.0
        %625 = vmatprep.subr.mxu0 0.0
        %626 = vmatpush1.msra.mxu0 0.0
        %627 = vmatprep.subr.mxu0 0.0
        %628 = vmatpush1.msra.mxu0 0.0
        %629 = vmatprep.subr.mxu0 0.0
        %630 = vmatpush1.msra.mxu0 0.0
        %631 = vmatprep.subr.mxu0 0.0
        %632 = vmatpush1.msra.mxu0 0.0
        %633 = vmatprep.subr.mxu0 0.0
        %634 = vmatpush1.msra.mxu0 0.0
        %635 = vmatprep.subr.mxu0 0.0
        %636 = vmatpush1.msra.mxu0 0.0
        %637 = vmatprep.subr.mxu0 0.0
        %638 = vmatpush1.msra.mxu0 0.0
        %639 = vmatprep.subr.mxu0 0.0
        %640 = vmatpush1.msra.mxu0 0.0
        %641 = vmatprep.subr.mxu0 0.0
        %642 = vmatpush1.msra.mxu0 0.0
        %643 = vmatprep.subr.mxu0 0.0
        %644 = vmatpush1.msra.mxu0 0.0
        %645 = vmatprep.subr.mxu0 0.0
        %646 = vmatpush1.msra.mxu0 0.0
        %647 = vmatprep.subr.mxu0 0.0
        %648 = vmatpush1.msra.mxu0 0.0
        %649 = vmatprep.subr.mxu0 0.0
        %650 = vmatpush1.msra.mxu0 0.0
        %651 = vmatprep.subr.mxu0 0.0
        %652 = vmatpush1.msra.mxu0 0.0
        %653 = vmatprep.subr.mxu0 0.0
        %654 = vmatpush1.msra.mxu0 0.0
        %655 = vmatprep.subr.mxu0 0.0
        %656 = vmatpush1.msra.mxu0 0.0
        %657 = vmatprep.subr.mxu0 0.0
        %658 = vmatpush1.msra.mxu0 0.0
        %659 = vmatprep.subr.mxu0 0.0
        %660 = vmatpush1.msra.mxu0 0.0
        %661 = vmatprep.subr.mxu0 0.0
        %662 = vmatpush1.msra.mxu0 0.0
        %663 = vmatprep.subr.mxu0 0.0
        %664 = vmatpush1.msra.mxu0 0.0
        %665 = vmatprep.subr.mxu0 0.0
        %666 = vmatpush1.msra.mxu0 0.0
        %667 = vmatprep.subr.mxu0 0.0
        %668 = vmatpush1.msra.mxu0 0.0
        %669 = vmatprep.subr.mxu0 0.0
        %670 = vmatpush1.msra.mxu0 0.0
        %671 = vmatprep.mubr.f32.mxu0 0.0
        %672 = vmatmul.mubr.f32.gmra.mrb[0].mxu0 %v288
        %v673 = vpop.f32.mrb[0].mxu0
        %v674 = vadd.f32 0.0, %v673
        %v675 = vpop.f32.mrb[0].mxu0
        %676 = vmatprep.mubr.f32.mxu0 0.0
        %677 = vmatmul.mubr.f32.gmra.mrb[0].mxu0 %v291
        %v678 = vpop.f32.mrb[0].mxu0
        %v679 = vadd.f32 0.0, %v678
        %v680 = vpop.f32.mrb[0].mxu0
        %681 = vdwg.mxu0
        %v683 = vsel %vm286, %v674, 0
        %v686 = vsel %vm286, %v679, 0
        %688 = vmatprep.subr.mxu0 0.0
        %689 = vmatpush1.msra.mxu0 %v284
        %690 = vmatprep.subr.mxu0 0.0
        %691 = vmatpush1.msra.mxu0 %v285
        %692 = vmatprep.subr.mxu0 0.0
        %693 = vmatpush1.msra.mxu0 0.0
        %694 = vmatprep.subr.mxu0 0.0
        %695 = vmatpush1.msra.mxu0 0.0
        %696 = vmatprep.subr.mxu0 0.0
        %697 = vmatpush1.msra.mxu0 0.0
        %698 = vmatprep.subr.mxu0 0.0
        %699 = vmatpush1.msra.mxu0 0.0
        %700 = vmatprep.subr.mxu0 0.0
        %701 = vmatpush1.msra.mxu0 0.0
        %702 = vmatprep.subr.mxu0 0.0
        %703 = vmatpush1.msra.mxu0 0.0
        %704 = vmatprep.subr.mxu0 0.0
        %705 = vmatpush1.msra.mxu0 0.0
        %706 = vmatprep.subr.mxu0 0.0
        %707 = vmatpush1.msra.mxu0 0.0
        %708 = vmatprep.subr.mxu0 0.0
        %709 = vmatpush1.msra.mxu0 0.0
        %710 = vmatprep.subr.mxu0 0.0
        %711 = vmatpush1.msra.mxu0 0.0
        %712 = vmatprep.subr.mxu0 0.0
        %713 = vmatpush1.msra.mxu0 0.0
        %714 = vmatprep.subr.mxu0 0.0
        %715 = vmatpush1.msra.mxu0 0.0
        %716 = vmatprep.subr.mxu0 0.0
        %717 = vmatpush1.msra.mxu0 0.0
        %718 = vmatprep.subr.mxu0 0.0
        %719 = vmatpush1.msra.mxu0 0.0
        %720 = vmatprep.subr.mxu0 0.0
        %721 = vmatpush1.msra.mxu0 0.0
        %722 = vmatprep.subr.mxu0 0.0
        %723 = vmatpush1.msra.mxu0 0.0
        %724 = vmatprep.subr.mxu0 0.0
        %725 = vmatpush1.msra.mxu0 0.0
        %726 = vmatprep.subr.mxu0 0.0
        %727 = vmatpush1.msra.mxu0 0.0
        %728 = vmatprep.subr.mxu0 0.0
        %729 = vmatpush1.msra.mxu0 0.0
        %730 = vmatprep.subr.mxu0 0.0
        %731 = vmatpush1.msra.mxu0 0.0
        %732 = vmatprep.subr.mxu0 0.0
        %733 = vmatpush1.msra.mxu0 0.0
        %734 = vmatprep.subr.mxu0 0.0
        %735 = vmatpush1.msra.mxu0 0.0
        %736 = vmatprep.subr.mxu0 0.0
        %737 = vmatpush1.msra.mxu0 0.0
        %738 = vmatprep.subr.mxu0 0.0
        %739 = vmatpush1.msra.mxu0 0.0
        %740 = vmatprep.subr.mxu0 0.0
        %741 = vmatpush1.msra.mxu0 0.0
        %742 = vmatprep.subr.mxu0 0.0
        %743 = vmatpush1.msra.mxu0 0.0
        %744 = vmatprep.subr.mxu0 0.0
        %745 = vmatpush1.msra.mxu0 0.0
        %746 = vmatprep.subr.mxu0 0.0
        %747 = vmatpush1.msra.mxu0 0.0
        %748 = vmatprep.subr.mxu0 0.0
        %749 = vmatpush1.msra.mxu0 0.0
        %750 = vmatprep.subr.mxu0 0.0
        %751 = vmatpush1.msra.mxu0 0.0
        %752 = vmatprep.mubr.f32.mxu0 0.0
        %753 = vmatmul.mubr.f32.gmra.mrb[0].mxu0 %v683
        %v754 = vpop.f32.mrb[0].mxu0
        %v755 = vadd.f32 0.0, %v754
        %v756 = vpop.f32.mrb[0].mxu0
        %757 = vmatprep.mubr.f32.mxu0 0.0
        %758 = vmatmul.mubr.f32.gmra.mrb[0].mxu0 %v686
        %v759 = vpop.f32.mrb[0].mxu0
        %v760 = vadd.f32 0.0, %v759
        %v761 = vpop.f32.mrb[0].mxu0
        %762 = vdwg.mxu0
        %v763 = vmul.f32 %v280, %v280
        %v764 = vmul.f32 %v281, %v281
        %765 = vmatprep.subr.mxu0 0.0
        %766 = vmatpush1.msra.mxu0 %v763
        %767 = vmatprep.subr.mxu0 0.0
        %768 = vmatpush1.msra.mxu0 %v764
        %769 = vmatprep.subr.mxu0 0.0
        %770 = vmatpush1.msra.mxu0 0.0
        %771 = vmatprep.subr.mxu0 0.0
        %772 = vmatpush1.msra.mxu0 0.0
        %773 = vmatprep.subr.mxu0 0.0
        %774 = vmatpush1.msra.mxu0 0.0
        %775 = vmatprep.subr.mxu0 0.0
        %776 = vmatpush1.msra.mxu0 0.0
        %777 = vmatprep.subr.mxu0 0.0
        %778 = vmatpush1.msra.mxu0 0.0
        %779 = vmatprep.subr.mxu0 0.0
        %780 = vmatpush1.msra.mxu0 0.0
        %781 = vmatprep.subr.mxu0 0.0
        %782 = vmatpush1.msra.mxu0 0.0
        %783 = vmatprep.subr.mxu0 0.0
        %784 = vmatpush1.msra.mxu0 0.0
        %785 = vmatprep.subr.mxu0 0.0
        %786 = vmatpush1.msra.mxu0 0.0
        %787 = vmatprep.subr.mxu0 0.0
        %788 = vmatpush1.msra.mxu0 0.0
        %789 = vmatprep.subr.mxu0 0.0
        %790 = vmatpush1.msra.mxu0 0.0
        %791 = vmatprep.subr.mxu0 0.0
        %792 = vmatpush1.msra.mxu0 0.0
        %793 = vmatprep.subr.mxu0 0.0
        %794 = vmatpush1.msra.mxu0 0.0
        %795 = vmatprep.subr.mxu0 0.0
        %796 = vmatpush1.msra.mxu0 0.0
        %797 = vmatprep.subr.mxu0 0.0
        %798 = vmatpush1.msra.mxu0 0.0
        %799 = vmatprep.subr.mxu0 0.0
        %800 = vmatpush1.msra.mxu0 0.0
        %801 = vmatprep.subr.mxu0 0.0
        %802 = vmatpush1.msra.mxu0 0.0
        %803 = vmatprep.subr.mxu0 0.0
        %804 = vmatpush1.msra.mxu0 0.0
        %805 = vmatprep.subr.mxu0 0.0
        %806 = vmatpush1.msra.mxu0 0.0
        %807 = vmatprep.subr.mxu0 0.0
        %808 = vmatpush1.msra.mxu0 0.0
        %809 = vmatprep.subr.mxu0 0.0
        %810 = vmatpush1.msra.mxu0 0.0
        %811 = vmatprep.subr.mxu0 0.0
        %812 = vmatpush1.msra.mxu0 0.0
        %813 = vmatprep.subr.mxu0 0.0
        %814 = vmatpush1.msra.mxu0 0.0
        %815 = vmatprep.subr.mxu0 0.0
        %816 = vmatpush1.msra.mxu0 0.0
        %817 = vmatprep.subr.mxu0 0.0
        %818 = vmatpush1.msra.mxu0 0.0
        %819 = vmatprep.subr.mxu0 0.0
        %820 = vmatpush1.msra.mxu0 0.0
        %821 = vmatprep.subr.mxu0 0.0
        %822 = vmatpush1.msra.mxu0 0.0
        %823 = vmatprep.subr.mxu0 0.0
        %824 = vmatpush1.msra.mxu0 0.0
        %825 = vmatprep.subr.mxu0 0.0
        %826 = vmatpush1.msra.mxu0 0.0
        %827 = vmatprep.subr.mxu0 0.0
        %828 = vmatpush1.msra.mxu0 0.0
        %829 = vmatprep.mubr.f32.mxu0 0.0
        %830 = vmatmul.mubr.f32.gmra.mrb[0].mxu0 %v288
        %v831 = vpop.f32.mrb[0].mxu0
        %v832 = vadd.f32 0.0, %v831
        %v833 = vpop.f32.mrb[0].mxu0
        %834 = vmatprep.mubr.f32.mxu0 0.0
        %835 = vmatmul.mubr.f32.gmra.mrb[0].mxu0 %v291
        %v836 = vpop.f32.mrb[0].mxu0
        %v837 = vadd.f32 0.0, %v836
        %v838 = vpop.f32.mrb[0].mxu0
        %839 = vdwg.mxu0
        %v841 = vsel %vm286, %v832, 0
        %v844 = vsel %vm286, %v837, 0
        %846 = vmatprep.subr.mxu0 0.0
        %847 = vmatpush1.msra.mxu0 %v284
        %848 = vmatprep.subr.mxu0 0.0
        %849 = vmatpush1.msra.mxu0 %v285
        %850 = vmatprep.subr.mxu0 0.0
        %851 = vmatpush1.msra.mxu0 0.0
        %852 = vmatprep.subr.mxu0 0.0
        %853 = vmatpush1.msra.mxu0 0.0
        %854 = vmatprep.subr.mxu0 0.0
        %855 = vmatpush1.msra.mxu0 0.0
        %856 = vmatprep.subr.mxu0 0.0
        %857 = vmatpush1.msra.mxu0 0.0
        %858 = vmatprep.subr.mxu0 0.0
        %859 = vmatpush1.msra.mxu0 0.0
        %860 = vmatprep.subr.mxu0 0.0
        %861 = vmatpush1.msra.mxu0 0.0
        %862 = vmatprep.subr.mxu0 0.0
        %863 = vmatpush1.msra.mxu0 0.0
        %864 = vmatprep.subr.mxu0 0.0
        %865 = vmatpush1.msra.mxu0 0.0
        %866 = vmatprep.subr.mxu0 0.0
        %867 = vmatpush1.msra.mxu0 0.0
        %868 = vmatprep.subr.mxu0 0.0
        %869 = vmatpush1.msra.mxu0 0.0
        %870 = vmatprep.subr.mxu0 0.0
        %871 = vmatpush1.msra.mxu0 0.0
        %872 = vmatprep.subr.mxu0 0.0
        %873 = vmatpush1.msra.mxu0 0.0
        %874 = vmatprep.subr.mxu0 0.0
        %875 = vmatpush1.msra.mxu0 0.0
        %876 = vmatprep.subr.mxu0 0.0
        %877 = vmatpush1.msra.mxu0 0.0
        %878 = vmatprep.subr.mxu0 0.0
        %879 = vmatpush1.msra.mxu0 0.0
        %880 = vmatprep.subr.mxu0 0.0
        %881 = vmatpush1.msra.mxu0 0.0
        %882 = vmatprep.subr.mxu0 0.0
        %883 = vmatpush1.msra.mxu0 0.0
        %884 = vmatprep.subr.mxu0 0.0
        %885 = vmatpush1.msra.mxu0 0.0
        %886 = vmatprep.subr.mxu0 0.0
        %887 = vmatpush1.msra.mxu0 0.0
        %888 = vmatprep.subr.mxu0 0.0
        %889 = vmatpush1.msra.mxu0 0.0
        %890 = vmatprep.subr.mxu0 0.0
        %891 = vmatpush1.msra.mxu0 0.0
        %892 = vmatprep.subr.mxu0 0.0
        %893 = vmatpush1.msra.mxu0 0.0
        %894 = vmatprep.subr.mxu0 0.0
        %895 = vmatpush1.msra.mxu0 0.0
        %896 = vmatprep.subr.mxu0 0.0
        %897 = vmatpush1.msra.mxu0 0.0
        %898 = vmatprep.subr.mxu0 0.0
        %899 = vmatpush1.msra.mxu0 0.0
        %900 = vmatprep.subr.mxu0 0.0
        %901 = vmatpush1.msra.mxu0 0.0
        %902 = vmatprep.subr.mxu0 0.0
        %903 = vmatpush1.msra.mxu0 0.0
        %904 = vmatprep.subr.mxu0 0.0
        %905 = vmatpush1.msra.mxu0 0.0
        %906 = vmatprep.subr.mxu0 0.0
        %907 = vmatpush1.msra.mxu0 0.0
        %908 = vmatprep.subr.mxu0 0.0
        %909 = vmatpush1.msra.mxu0 0.0
        %910 = vmatprep.mubr.f32.mxu0 0.0
        %911 = vmatmul.mubr.f32.gmra.mrb[0].mxu0 %v841
        %v912 = vpop.f32.mrb[0].mxu0
        %v913 = vadd.f32 0.0, %v912
        %v914 = vpop.f32.mrb[0].mxu0
        %915 = vmatprep.mubr.f32.mxu0 0.0
        %916 = vmatmul.mubr.f32.gmra.mrb[0].mxu0 %v844
        %v917 = vpop.f32.mrb[0].mxu0
        %v918 = vadd.f32 0.0, %v917
        %v919 = vpop.f32.mrb[0].mxu0
        %920 = vdwg.mxu0
        %v921 = vmul.f32 %v278, %v280
        %v922 = vmul.f32 %v279, %v281
        %923 = vmatprep.subr.mxu0 0.0
        %924 = vmatpush1.msra.mxu0 %v921
        %925 = vmatprep.subr.mxu0 0.0
        %926 = vmatpush1.msra.mxu0 %v922
        %927 = vmatprep.subr.mxu0 0.0
        %928 = vmatpush1.msra.mxu0 0.0
        %929 = vmatprep.subr.mxu0 0.0
        %930 = vmatpush1.msra.mxu0 0.0
        %931 = vmatprep.subr.mxu0 0.0
        %932 = vmatpush1.msra.mxu0 0.0
        %933 = vmatprep.subr.mxu0 0.0
        %934 = vmatpush1.msra.mxu0 0.0
        %935 = vmatprep.subr.mxu0 0.0
        %936 = vmatpush1.msra.mxu0 0.0
        %937 = vmatprep.subr.mxu0 0.0
        %938 = vmatpush1.msra.mxu0 0.0
        %939 = vmatprep.subr.mxu0 0.0
        %940 = vmatpush1.msra.mxu0 0.0
        %941 = vmatprep.subr.mxu0 0.0
        %942 = vmatpush1.msra.mxu0 0.0
        %943 = vmatprep.subr.mxu0 0.0
        %944 = vmatpush1.msra.mxu0 0.0
        %945 = vmatprep.subr.mxu0 0.0
        %946 = vmatpush1.msra.mxu0 0.0
        %947 = vmatprep.subr.mxu0 0.0
        %948 = vmatpush1.msra.mxu0 0.0
        %949 = vmatprep.subr.mxu0 0.0
        %950 = vmatpush1.msra.mxu0 0.0
        %951 = vmatprep.subr.mxu0 0.0
        %952 = vmatpush1.msra.mxu0 0.0
        %953 = vmatprep.subr.mxu0 0.0
        %954 = vmatpush1.msra.mxu0 0.0
        %955 = vmatprep.subr.mxu0 0.0
        %956 = vmatpush1.msra.mxu0 0.0
        %957 = vmatprep.subr.mxu0 0.0
        %958 = vmatpush1.msra.mxu0 0.0
        %959 = vmatprep.subr.mxu0 0.0
        %960 = vmatpush1.msra.mxu0 0.0
        %961 = vmatprep.subr.mxu0 0.0
        %962 = vmatpush1.msra.mxu0 0.0
        %963 = vmatprep.subr.mxu0 0.0
        %964 = vmatpush1.msra.mxu0 0.0
        %965 = vmatprep.subr.mxu0 0.0
        %966 = vmatpush1.msra.mxu0 0.0
        %967 = vmatprep.subr.mxu0 0.0
        %968 = vmatpush1.msra.mxu0 0.0
        %969 = vmatprep.subr.mxu0 0.0
        %970 = vmatpush1.msra.mxu0 0.0
        %971 = vmatprep.subr.mxu0 0.0
        %972 = vmatpush1.msra.mxu0 0.0
        %973 = vmatprep.subr.mxu0 0.0
        %974 = vmatpush1.msra.mxu0 0.0
        %975 = vmatprep.subr.mxu0 0.0
        %976 = vmatpush1.msra.mxu0 0.0
        %977 = vmatprep.subr.mxu0 0.0
        %978 = vmatpush1.msra.mxu0 0.0
        %979 = vmatprep.subr.mxu0 0.0
        %980 = vmatpush1.msra.mxu0 0.0
        %981 = vmatprep.subr.mxu0 0.0
        %982 = vmatpush1.msra.mxu0 0.0
        %983 = vmatprep.subr.mxu0 0.0
        %984 = vmatpush1.msra.mxu0 0.0
        %985 = vmatprep.subr.mxu0 0.0
        %986 = vmatpush1.msra.mxu0 0.0
        %987 = vmatprep.mubr.f32.mxu0 0.0
        %988 = vmatmul.mubr.f32.gmra.mrb[0].mxu0 %v288
        %v989 = vpop.f32.mrb[0].mxu0
        %v990 = vadd.f32 0.0, %v989
        %v991 = vpop.f32.mrb[0].mxu0
        %992 = vmatprep.mubr.f32.mxu0 0.0
        %993 = vmatmul.mubr.f32.gmra.mrb[0].mxu0 %v291
        %v994 = vpop.f32.mrb[0].mxu0
        %v995 = vadd.f32 0.0, %v994
        %v996 = vpop.f32.mrb[0].mxu0
        %997 = vdwg.mxu0
        %v999 = vsel %vm286, %v990, 0
        %v1002 = vsel %vm286, %v995, 0
        %1004 = vmatprep.subr.mxu0 0.0
        %1005 = vmatpush1.msra.mxu0 %v284
        %1006 = vmatprep.subr.mxu0 0.0
        %1007 = vmatpush1.msra.mxu0 %v285
        %1008 = vmatprep.subr.mxu0 0.0
        %1009 = vmatpush1.msra.mxu0 0.0
        %1010 = vmatprep.subr.mxu0 0.0
        %1011 = vmatpush1.msra.mxu0 0.0
        %1012 = vmatprep.subr.mxu0 0.0
        %1013 = vmatpush1.msra.mxu0 0.0
        %1014 = vmatprep.subr.mxu0 0.0
        %1015 = vmatpush1.msra.mxu0 0.0
        %1016 = vmatprep.subr.mxu0 0.0
        %1017 = vmatpush1.msra.mxu0 0.0
        %1018 = vmatprep.subr.mxu0 0.0
        %1019 = vmatpush1.msra.mxu0 0.0
        %1020 = vmatprep.subr.mxu0 0.0
        %1021 = vmatpush1.msra.mxu0 0.0
        %1022 = vmatprep.subr.mxu0 0.0
        %1023 = vmatpush1.msra.mxu0 0.0
        %1024 = vmatprep.subr.mxu0 0.0
        %1025 = vmatpush1.msra.mxu0 0.0
        %1026 = vmatprep.subr.mxu0 0.0
        %1027 = vmatpush1.msra.mxu0 0.0
        %1028 = vmatprep.subr.mxu0 0.0
        %1029 = vmatpush1.msra.mxu0 0.0
        %1030 = vmatprep.subr.mxu0 0.0
        %1031 = vmatpush1.msra.mxu0 0.0
        %1032 = vmatprep.subr.mxu0 0.0
        %1033 = vmatpush1.msra.mxu0 0.0
        %1034 = vmatprep.subr.mxu0 0.0
        %1035 = vmatpush1.msra.mxu0 0.0
        %1036 = vmatprep.subr.mxu0 0.0
        %1037 = vmatpush1.msra.mxu0 0.0
        %1038 = vmatprep.subr.mxu0 0.0
        %1039 = vmatpush1.msra.mxu0 0.0
        %1040 = vmatprep.subr.mxu0 0.0
        %1041 = vmatpush1.msra.mxu0 0.0
        %1042 = vmatprep.subr.mxu0 0.0
        %1043 = vmatpush1.msra.mxu0 0.0
        %1044 = vmatprep.subr.mxu0 0.0
        %1045 = vmatpush1.msra.mxu0 0.0
        %1046 = vmatprep.subr.mxu0 0.0
        %1047 = vmatpush1.msra.mxu0 0.0
        %1048 = vmatprep.subr.mxu0 0.0
        %1049 = vmatpush1.msra.mxu0 0.0
        %1050 = vmatprep.subr.mxu0 0.0
        %1051 = vmatpush1.msra.mxu0 0.0
        %1052 = vmatprep.subr.mxu0 0.0
        %1053 = vmatpush1.msra.mxu0 0.0
        %1054 = vmatprep.subr.mxu0 0.0
        %1055 = vmatpush1.msra.mxu0 0.0
        %1056 = vmatprep.subr.mxu0 0.0
        %1057 = vmatpush1.msra.mxu0 0.0
        %1058 = vmatprep.subr.mxu0 0.0
        %1059 = vmatpush1.msra.mxu0 0.0
        %1060 = vmatprep.subr.mxu0 0.0
        %1061 = vmatpush1.msra.mxu0 0.0
        %1062 = vmatprep.subr.mxu0 0.0
        %1063 = vmatpush1.msra.mxu0 0.0
        %1064 = vmatprep.subr.mxu0 0.0
        %1065 = vmatpush1.msra.mxu0 0.0
        %1066 = vmatprep.subr.mxu0 0.0
        %1067 = vmatpush1.msra.mxu0 0.0
        %1068 = vmatprep.mubr.f32.mxu0 0.0
        %1069 = vmatmul.mubr.f32.gmra.mrb[0].mxu0 %v999
        %v1070 = vpop.f32.mrb[0].mxu0
        %v1071 = vadd.f32 0.0, %v1070
        %v1072 = vpop.f32.mrb[0].mxu0
        %1073 = vmatprep.mubr.f32.mxu0 0.0
        %1074 = vmatmul.mubr.f32.gmra.mrb[0].mxu0 %v1002
        %v1075 = vpop.f32.mrb[0].mxu0
        %v1076 = vadd.f32 0.0, %v1075
        %v1077 = vpop.f32.mrb[0].mxu0
        %1078 = vdwg.mxu0
        %v1079 = vmul.f32 %v441, %v441
        %v1080 = vmul.f32 %v446, %v446
        %v1081 = vmul.f32 %v597, %v597
        %v1082 = vmul.f32 %v602, %v602
        %v1083 = vmul.f32 %v441, %v597
        %v1084 = vmul.f32 %v446, %v602
        %v1085 = vsub.f32 %v755, %v1079
        %v1086 = vsub.f32 %v760, %v1080
        %v1087 = vsub.f32 %v913, %v1081
        %v1088 = vsub.f32 %v918, %v1082
        %v1089 = vsub.f32 %v1071, %v1083
        %v1090 = vsub.f32 %v1076, %v1084
        %v1091 = vmul.f32 %v1083, 2.0
        %v1092 = vmul.f32 %v1084, 2.0
        %v1093 = vadd.f32 %v1091, 0.0001
        %v1094 = vadd.f32 %v1092, 0.0001
        %v1095 = vmul.f32 %v1089, 2.0
        %v1096 = vmul.f32 %v1090, 2.0
        %v1097 = vadd.f32 %v1095, 0.0009
        %v1098 = vadd.f32 %v1096, 0.0009
        %v1099 = vmul.f32 %v1093, %v1097
        %v1100 = vmul.f32 %v1094, %v1098
        %v1101 = vadd.f32 %v1079, %v1081
        %v1102 = vadd.f32 %v1080, %v1082
        %v1103 = vadd.f32 %v1101, 0.0001
        %v1104 = vadd.f32 %v1102, 0.0001
        %v1105 = vadd.f32 %v1085, %v1087
        %v1106 = vadd.f32 %v1086, %v1088
        %v1107 = vadd.f32 %v1105, 0.0009
        %v1108 = vadd.f32 %v1106, 0.0009
        %v1109 = vmul.f32 %v1103, %v1107
        %v1110 = vmul.f32 %v1104, %v1108
        %v1111 = vrcp.pop %v1109
        %v1112 = vmul.f32 %v1099, %v1111
        %v1113 = vrcp.pop %v1110
        %v1114 = vmul.f32 %v1100, %v1113
        %s1115 = sld [smem:[#allocation2]]
        %v1116 = vsel %vm286, %v1112, 0.0
        %v1117 = vsel %vm286, %v1114, 0.0
        %v1118 = vadd.f32 %v1116, %v1117
        %1119 = vadd.xlane.f32.xlu0 %v1118
        %v1120 = vpop.xlane.xlu0 %1119
        %v1121 = vrot.slane %v1120, 4
        %v1122 = vadd.f32 %v1120, %v1121
        %v1123 = vrot.slane %v1122, 2
        %v1124 = vadd.f32 %v1122, %v1123
        %v1125 = vrot.slane %v1124, 1
        %v1126 = vadd.f32 %v1124, %v1125
        %s1127 = vtos %v1126
        %s1128 = sadd.f32 %s1115, %s1127
        %s1129 = scalar_lea.smem [#allocation2], 0
        %1130 = sst [smem:[%s1129]] %s1128
        %s1131 = sld [smem:[#allocation2 + $0x1]]
        %v1132 = vsub.f32 %v278, %v280
        %v1133 = vsub.f32 %v279, %v281
        %v1134 = vand.u32 2147483647, %v1132
        %v1135 = vand.u32 2147483647, %v1133
        %v1136 = vsel %vm286, %v1134, 0.0
        %v1137 = vsel %vm286, %v1135, 0.0
        %v1138 = vadd.f32 %v1136, %v1137
        %1139 = vadd.xlane.f32.xlu0 %v1138
        %v1140 = vpop.xlane.xlu0 %1139
        %v1141 = vrot.slane %v1140, 4
        %v1142 = vadd.f32 %v1140, %v1141
        %v1143 = vrot.slane %v1142, 2
        %v1144 = vadd.f32 %v1142, %v1143
        %v1145 = vrot.slane %v1144, 1
        %v1146 = vadd.f32 %v1144, %v1145
        %s1147 = vtos %v1146
        %s1148 = sadd.f32 %s1131, %s1147
        %s1149 = scalar_lea.smem [#allocation2], 1
        %1150 = sst [smem:[%s1149]] %s1148
        %p1151 = scmp.eq.s32.totalorder %s25, 5
        // Predicated region
        $region49: #{fixed_loss_gray_forward.2} parent=35 // pred_check
          %p1152 = pneg %p1151
        $region50: #{fixed_loss_gray_forward.2} parent=35 // pred_check_branch
          %1154 = sbr.rel (%p1152) target = $region52
        $region51: #{fixed_loss_gray_forward.2} parent=35 // pred_region
          %s1155 = sld [smem:[#allocation2]]
          %s1156 = scalar_lea.smem [#allocation8], 0
          %1157 = sst [smem:[%s1156]] %s1155
          %s1158 = sld [smem:[#allocation2 + $0x1]]
          %s1159 = scalar_lea.smem [#allocation9], 0
          %1160 = sst [smem:[%s1159]] %s1158
        $region52: #{fixed_loss_gray_forward.2} parent=35 // pred_fallthru
          _
        // Predicated region
        $region53: #{fixed_loss_gray_forward.2} parent=35 // pred_check
          %p1161 = pneg %p132
        $region54: #{fixed_loss_gray_forward.2} parent=35 // pred_check_branch
          %1163 = sbr.rel (%p1161) target = $region56
        $region55: #{fixed_loss_gray_forward.2} parent=35 // pred_region
          %s1165 = ssub.s32 16, 16
          %1166 = vsyncadd [#allocation5], %s1165
          %1169 = dma.smem_to_hbm [#allocation8], 16, %s4, [#allocation5]
        $region56: #{fixed_loss_gray_forward.2} parent=35 // pred_fallthru
          _
        // Predicated region
        $region57: #{fixed_loss_gray_forward.2} parent=35 // pred_check
          %p1170 = pneg %p153
        $region58: #{fixed_loss_gray_forward.2} parent=35 // pred_check_branch
          %1172 = sbr.rel (%p1170) target = $region60
        $region59: #{fixed_loss_gray_forward.2} parent=35 // pred_region
          %s1174 = ssub.s32 16, 16
          %1175 = vsyncadd [#allocation10], %s1174
          %1178 = dma.smem_to_hbm [#allocation9], 16, %s5, [#allocation10]
        $region60: #{fixed_loss_gray_forward.2} parent=35 // pred_fallthru
          _
        // Predicated region
        $region61: #{fixed_loss_gray_forward.2} parent=35 // pred_check
          %p1179 = pneg %p132
        $region62: #{fixed_loss_gray_forward.2} parent=35 // pred_check_branch
          %1181 = sbr.rel (%p1179) target = $region64
        $region63: #{fixed_loss_gray_forward.2} parent=35 // pred_region
          %1182 = dma.done [#allocation5], 16
        $region64: #{fixed_loss_gray_forward.2} parent=35 // pred_fallthru
          _
        // Predicated region
        $region65: #{fixed_loss_gray_forward.2} parent=35 // pred_check
          %p1183 = pneg %p153
        $region66: #{fixed_loss_gray_forward.2} parent=35 // pred_check_branch
          %1185 = sbr.rel (%p1183) target = $region68
        $region67: #{fixed_loss_gray_forward.2} parent=35 // pred_region
          %1186 = dma.done [#allocation10], 16
        $region68: #{fixed_loss_gray_forward.2} parent=35 // pred_fallthru
          _
        %1187 = sfence
      $region36: #{fixed_loss_gray_forward.2} parent=5 // pred_fallthru
        _
      %p1188 = scmp.le.s32.totalorder 2, %s20
      // Predicated region
      $region69: #{fixed_loss_gray_forward.2} parent=5 // pred_check
        %p1189 = pneg %p1188
      $region70: #{fixed_loss_gray_forward.2} parent=5 // pred_check_branch
        %1191 = sbr.rel (%p1189) target = $region72
      $region71: #{fixed_loss_gray_forward.2} parent=5 // pred_region
        %s1192 = ssub.s32 %s20, 2
      $region72: #{fixed_loss_gray_forward.2} parent=5 // pred_fallthru
        _
    $region6: #{fixed_loss_gray_forward.2} parent=1 // loop_footer
      %s24 = sadd.s32 1, %s20
    $region7: #{fixed_loss_gray_forward.2} parent=1 // loop_footer_branch
      %19 = sbr.rel target = $region3
    $region8: #{fixed_loss_gray_forward.2} parent=1 // loop_exit
      _
    %1193 = vsyncpa [#allocation4], 1
    %s1194 = scalar_lea.sflag [#allocation4], 1
    %1195 = vsyncpa %s1194, 1
    %1196 = vsyncpa [#allocation7], 1
    %s1197 = scalar_lea.sflag [#allocation7], 1
    %1198 = vsyncpa %s1197, 1
    %1199 = vsyncpa [#allocation5], 1
    %s1200 = scalar_lea.sflag [#allocation5], 1
    %1201 = vsyncpa %s1200, 1
    %1202 = vsyncpa [#allocation10], 1

</llo_original>
